<compile_context>
chip_gen: v7x
topology: tpu7x:2x2x1
jax: 0.10.0
libtpu: 0.0.40
codegen_flags: <defaults>
</compile_context>

<pallas_src>
import functools
import math

import jax
import jax.numpy as jnp
from jax.experimental import pallas as pl
from jax.experimental.pallas import tpu as pltpu


# ----------------------------------------------------------------------------
# Fused EncoderLayer kernel. Grid = (batch, q-tile).
# ----------------------------------------------------------------------------
def encoder_layer_kernel(x_ref, mask_ref,
                         wq_ref, bq_ref, wkv_ref, bkv_ref,
                         wo_ref, bo_ref,
                         g1_ref, be1_ref,
                         w1_ref, b1_ref, w2_ref, b2_ref,
                         g2_ref, be2_ref,
                         out_ref,
                         kv_sc,
                         *, n_head, tq, eps, compute_dtype, approx_recip):
    f32 = jnp.float32
    cdt = compute_dtype
    qt = pl.program_id(1)
    _, L, H = x_ref.shape
    hd = H // n_head

    # ---- K/V projection for the WHOLE sequence: once per batch element ------
    # wkv_ref: (H, 2H), columns = [k_h0 .. k_h{nh-1} | v_h0 .. v_h{nh-1}]
    @pl.when(qt == 0)
    def _():
        x_all = x_ref[0].astype(cdt)                                # (L, H)
        kv = jnp.dot(x_all, wkv_ref[...],
                     preferred_element_type=f32) + bkv_ref[...]     # (L, 2H) f32
        kv_sc[...] = kv.astype(cdt)

    # ---- Q projection for this query tile (1/sqrt(H) pre-folded into Wq/bq) -
    row0 = pl.multiple_of(qt * tq, tq)
    x_tile = x_ref[0, pl.ds(row0, tq), :]                           # (tq, H) f32
    q_tile = jnp.dot(x_tile.astype(cdt), wq_ref[...],
                     preferred_element_type=f32) + bq_ref[...]      # (tq, H) f32

    key_valid = mask_ref[0]                                         # (1, L) int32
    neg_inf = jnp.float32(-1e10)

    # ---- per-head scaled dot-product attention (heads = static lane slices) -
    # TODO(synk): for very long L switch this static Python loop to a
    # lax.fori_loop over a head-major (nh, L, hd) scratch so that per-head
    # live ranges are hard-bounded by the loop.
    ctx_heads = []
    for h in range(n_head):
        q_h = q_tile[:, h * hd:(h + 1) * hd].astype(cdt)            # (tq, hd)
        k_h = kv_sc[:, h * hd:(h + 1) * hd]                         # (L, hd) cdt
        v_h = kv_sc[:, H + h * hd:H + (h + 1) * hd]                 # (L, hd) cdt
        e_h = jnp.einsum('qd,kd->qk', q_h, k_h,
                         preferred_element_type=f32)                # (tq, L) f32
        e_h = jnp.where(key_valid == 0, neg_inf, e_h)
        m_h = jnp.max(e_h, axis=-1, keepdims=True)
        p_h = jnp.exp(e_h - m_h)
        d_h = jnp.sum(p_h, axis=-1, keepdims=True)
        a_h = p_h * pl.reciprocal(d_h, approx=approx_recip)         # EUP recip
        ctx_heads.append(jnp.dot(a_h.astype(cdt), v_h,
                                 preferred_element_type=f32))       # (tq, hd)
    ctx = jnp.concatenate(ctx_heads, axis=-1)                       # (tq, H) f32

    # ---- output projection: single full-width matmul on concat(heads) -------
    sa = jnp.dot(ctx.astype(cdt), wo_ref[...],
                 preferred_element_type=f32) + bo_ref[...]          # (tq, H)

    # ---- residual + LayerNorm 1 ----------------------------------------------
    y = x_tile + sa
    mu = jnp.mean(y, axis=-1, keepdims=True)
    var = jnp.mean(jnp.square(y - mu), axis=-1, keepdims=True)
    x1 = (y - mu) * jax.lax.rsqrt(var + eps) * g1_ref[...] + be1_ref[...]

    # ---- position-wise feed-forward -------------------------------------------
    h1 = jnp.dot(x1.astype(cdt), w1_ref[...],
                 preferred_element_type=f32) + b1_ref[...]
    h1 = jnp.maximum(h1, 0.0)
    ff = jnp.dot(h1.astype(cdt), w2_ref[...],
                 preferred_element_type=f32) + b2_ref[...]

    # ---- residual + LayerNorm 2 -----------------------------------------------
    y2 = x1 + ff
    mu2 = jnp.mean(y2, axis=-1, keepdims=True)
    var2 = jnp.mean(jnp.square(y2 - mu2), axis=-1, keepdims=True)
    out = (y2 - mu2) * jax.lax.rsqrt(var2 + eps) * g2_ref[...] + be2_ref[...]
    out_ref[0] = out.astype(out_ref.dtype)


# ----------------------------------------------------------------------------
# Wrapper: weight re-layout / dtype cast (plain JAX) + single pallas_call
# ----------------------------------------------------------------------------
def _rep_spec(shape):
    """BlockSpec for a parameter replicated across the (batch, q-tile) grid."""
    nd = len(shape)
    return pl.BlockSpec(shape, lambda b, qt, _nd=nd: (0,) * _nd)


def encoder_layer(src, src_mask, params, n_head, *,
                  compute_dtype=jnp.bfloat16, eps=1e-5, tq=None,
                  approx_softmax_recip=True, vmem_limit_bytes=None):
    """Fused EncoderLayer forward pass.

    src:      (B, L, H) float32
    src_mask: key-padding mask, shape (B, L) / (B, 1, L) / (B, 1, 1, L);
              nonzero = attend, 0 = masked (the Encoder's src_mask use case).
    """
    B, L, H = src.shape
    assert H % n_head == 0
    cdt = compute_dtype
    f32 = jnp.float32

    if tq is None:
        tq = 256 if (L % 256 == 0) else L      # q-tile rows per grid step
    assert L % tq == 0
    n_qt = L // tq

    # TODO(synk): arbitrary (L,L) attention masks would need a (B,L,L) input;
    # only key-padding masks are supported here.
    mask_kp = src_mask.reshape(B, 1, L).astype(jnp.int32)

    inv_scale = 1.0 / math.sqrt(float(H))
    wq_c = (params['wq'] * inv_scale).astype(cdt)                    # (H, H)
    bq_s = (params['bq'] * inv_scale).astype(f32)                    # (1, H)
    wkv_c = jnp.concatenate([params['wk'], params['wv']], axis=1).astype(cdt)
    bkv = jnp.concatenate([params['bk'], params['bv']], axis=1).astype(f32)
    wo_c = params['wo'].astype(cdt)
    w1_c = params['w1'].astype(cdt)
    w2_c = params['w2'].astype(cdt)
    bo, b1, b2 = params['bo'], params['b1'], params['b2']            # keep f32
    g1, be1 = params['ln1_g'], params['ln1_b']
    g2, be2 = params['ln2_g'], params['ln2_b']

    kernel = functools.partial(
        encoder_layer_kernel, n_head=n_head, tq=tq, eps=eps,
        compute_dtype=cdt, approx_recip=approx_softmax_recip)

    # TODO(synk): on v7x single-buffer the constant-index weight blocks
    # (pipeline_mode=pl.Buffered(1)) and set vmem_limit_bytes <= ~56 MiB; on
    # v6e raise vmem_limit_bytes toward ~100 MiB for realistic H / pf_dim.
    return pl.pallas_call(
        kernel,
        out_shape=jax.ShapeDtypeStruct((B, L, H), jnp.float32),
        grid=(B, n_qt),
        in_specs=[
            pl.BlockSpec((1, L, H), lambda b, qt: (b, 0, 0)),   # src (resident per b)
            pl.BlockSpec((1, 1, L), lambda b, qt: (b, 0, 0)),   # key-padding mask
            _rep_spec(wq_c.shape), _rep_spec(bq_s.shape),
            _rep_spec(wkv_c.shape), _rep_spec(bkv.shape),
            _rep_spec(wo_c.shape), _rep_spec(bo.shape),
            _rep_spec(g1.shape), _rep_spec(be1.shape),
            _rep_spec(w1_c.shape), _rep_spec(b1.shape),
            _rep_spec(w2_c.shape), _rep_spec(b2.shape),
            _rep_spec(g2.shape), _rep_spec(be2.shape),
        ],
        out_specs=pl.BlockSpec((1, tq, H), lambda b, qt: (b, qt, 0)),
        scratch_shapes=[pltpu.VMEM((L, 2 * H), cdt)],           # per-batch K/V cache
        compiler_params=pltpu.CompilerParams(
            dimension_semantics=("parallel", "arbitrary"),
            vmem_limit_bytes=vmem_limit_bytes),
    )(src, mask_kp, wq_c, bq_s, wkv_c, bkv, wo_c, bo,
      g1, be1, w1_c, b1, w2_c, b2, g2, be2)


# ----------------------------------------------------------------------------
# Pure-JAX reference mirroring the PyTorch EncoderLayer (eval mode)
# ----------------------------------------------------------------------------
def encoder_layer_reference(src, key_padding_mask, params, n_head, eps=1e-5):
    B, L, H = src.shape
    hd = H // n_head
    scale = math.sqrt(float(H))

    q = src @ params['wq'] + params['bq'][0]
    k = src @ params['wk'] + params['bk'][0]
    v = src @ params['wv'] + params['bv'][0]
    q = q.reshape(B, L, n_head, hd).transpose(0, 2, 1, 3)
    k = k.reshape(B, L, n_head, hd).transpose(0, 2, 1, 3)
    v = v.reshape(B, L, n_head, hd).transpose(0, 2, 1, 3)

    e = jnp.einsum('bhqd,bhkd->bhqk', q, k) / scale
    e = jnp.where(key_padding_mask.reshape(B, 1, 1, L) == 0.0, -1e10, e)
    a = jax.nn.softmax(e, axis=-1)
    c = jnp.einsum('bhqk,bhkd->bhqd', a, v).transpose(0, 2, 1, 3).reshape(B, L, H)
    sa = c @ params['wo'] + params['bo'][0]

    def ln(y, g, b):
        m = y.mean(-1, keepdims=True)
        var = ((y - m) ** 2).mean(-1, keepdims=True)
        return (y - m) / jnp.sqrt(var + eps) * g[0] + b[0]

    x1 = ln(src + sa, params['ln1_g'], params['ln1_b'])
    ff = jnp.maximum(x1 @ params['w1'] + params['b1'][0], 0.0) @ params['w2'] \
        + params['b2'][0]
    return ln(x1 + ff, params['ln2_g'], params['ln2_b'])


# ----------------------------------------------------------------------------
# Deterministic parameter initialization
# ----------------------------------------------------------------------------
def init_params(key, hid_dim, pf_dim):
    keys = iter(jax.random.split(key, 12))

    def lin(din, dout, s=0.08):
        return (jax.random.normal(next(keys), (din, dout), jnp.float32) * s,
                jax.random.normal(next(keys), (1, dout), jnp.float32) * s)

    wq, bq = lin(hid_dim, hid_dim)
    wk, bk = lin(hid_dim, hid_dim)
    wv, bv = lin(hid_dim, hid_dim)
    wo, bo = lin(hid_dim, hid_dim)
    w1, b1 = lin(hid_dim, pf_dim)
    w2, b2 = lin(pf_dim, hid_dim)
    return dict(
        wq=wq, bq=bq, wk=wk, bk=bk, wv=wv, bv=bv, wo=wo, bo=bo,
        ln1_g=jnp.ones((1, hid_dim), jnp.float32),
        ln1_b=jnp.zeros((1, hid_dim), jnp.float32),
        w1=w1, b1=b1, w2=w2, b2=b2,
        ln2_g=jnp.ones((1, hid_dim), jnp.float32),
        ln2_b=jnp.zeros((1, hid_dim), jnp.float32))


# ----------------------------------------------------------------------------
if __name__ == "__main__":
    HID_DIM, N_HEAD, PF_DIM = 32, 4, 64
    B, L = 2, 8

    key = jax.random.PRNGKey(0)
    k_par, k_src = jax.random.split(key)
    params = init_params(k_par, HID_DIM, PF_DIM)
    src = jax.random.normal(k_src, (B, L, HID_DIM), jnp.float32)

    # Key-padding mask: last two source positions of batch 1 are masked out.
    key_pad = jnp.ones((B, L), jnp.float32).at[1, -2:].set(0.0)

    ref = encoder_layer_reference(src, key_pad, params, N_HEAD)

    # f32 MXU path with exact softmax reciprocal: tight parity check.
    out_f32 = jax.block_until_ready(
        encoder_layer(src, key_pad, params, N_HEAD,
                      compute_dtype=jnp.float32,
                      approx_softmax_recip=False))
    assert out_f32.shape == (B, L, HID_DIM)
    assert jnp.allclose(out_f32, ref, atol=5e-4, rtol=5e-4), \
        float(jnp.max(jnp.abs(out_f32 - ref)))

    # Default path: bf16 MXU inputs, f32 accumulation/statistics, EUP reciprocal.
    out_bf16 = jax.block_until_ready(encoder_layer(src, key_pad, params, N_HEAD))
    assert jnp.allclose(out_bf16, ref, atol=5e-2, rtol=5e-2), \
        float(jnp.max(jnp.abs(out_bf16 - ref)))

    print("KERNEL_OK")
</pallas_src>

<mosaic_0001>
module attributes {stable_mosaic.version = 11 : i64} {
  func.func @encoder_layer_kernel(%arg0: i32, %arg1: i32, %arg2: memref<1x8x32xf32, #tpu.memory_space<vmem>>, %arg3: memref<1x1x8xi32, #tpu.memory_space<vmem>>, %arg4: memref<32x32xf32, #tpu.memory_space<vmem>>, %arg5: memref<1x32xf32, #tpu.memory_space<vmem>>, %arg6: memref<32x64xf32, #tpu.memory_space<vmem>>, %arg7: memref<1x64xf32, #tpu.memory_space<vmem>>, %arg8: memref<32x32xf32, #tpu.memory_space<vmem>>, %arg9: memref<1x32xf32, #tpu.memory_space<vmem>>, %arg10: memref<1x32xf32, #tpu.memory_space<vmem>>, %arg11: memref<1x32xf32, #tpu.memory_space<vmem>>, %arg12: memref<32x64xf32, #tpu.memory_space<vmem>>, %arg13: memref<1x64xf32, #tpu.memory_space<vmem>>, %arg14: memref<64x32xf32, #tpu.memory_space<vmem>>, %arg15: memref<1x32xf32, #tpu.memory_space<vmem>>, %arg16: memref<1x32xf32, #tpu.memory_space<vmem>>, %arg17: memref<1x32xf32, #tpu.memory_space<vmem>>, %arg18: memref<1x8x32xf32, #tpu.memory_space<vmem>>, %arg19: memref<8x64xf32, #tpu.memory_space<vmem>>) attributes {dimension_semantics = [#tpu.dimension_semantics<parallel>, #tpu.dimension_semantics<arbitrary>], iteration_bounds = array<i64: 2, 1>, scalar_prefetch = 0 : i64, scratch_operands = 1 : i64, tpu.core_type = #tpu.core_type<tc>, window_params = [{transform_indices = @transform_0, window_bounds = array<i64: 1, 8, 32>}, {transform_indices = @transform_1, window_bounds = array<i64: 1, 1, 8>}, {pipeline_mode = #tpu.pipeline_mode<synchronous>, transform_indices = @transform_2, window_bounds = array<i64: 32, 32>}, {pipeline_mode = #tpu.pipeline_mode<synchronous>, transform_indices = @transform_3, window_bounds = array<i64: 1, 32>}, {pipeline_mode = #tpu.pipeline_mode<synchronous>, transform_indices = @transform_4, window_bounds = array<i64: 32, 64>}, {pipeline_mode = #tpu.pipeline_mode<synchronous>, transform_indices = @transform_5, window_bounds = array<i64: 1, 64>}, {pipeline_mode = #tpu.pipeline_mode<synchronous>, transform_indices = @transform_6, window_bounds = array<i64: 32, 32>}, {pipeline_mode = #tpu.pipeline_mode<synchronous>, transform_indices = @transform_7, window_bounds = array<i64: 1, 32>}, {pipeline_mode = #tpu.pipeline_mode<synchronous>, transform_indices = @transform_8, window_bounds = array<i64: 1, 32>}, {pipeline_mode = #tpu.pipeline_mode<synchronous>, transform_indices = @transform_9, window_bounds = array<i64: 1, 32>}, {pipeline_mode = #tpu.pipeline_mode<synchronous>, transform_indices = @transform_10, window_bounds = array<i64: 32, 64>}, {pipeline_mode = #tpu.pipeline_mode<synchronous>, transform_indices = @transform_11, window_bounds = array<i64: 1, 64>}, {pipeline_mode = #tpu.pipeline_mode<synchronous>, transform_indices = @transform_12, window_bounds = array<i64: 64, 32>}, {pipeline_mode = #tpu.pipeline_mode<synchronous>, transform_indices = @transform_13, window_bounds = array<i64: 1, 32>}, {pipeline_mode = #tpu.pipeline_mode<synchronous>, transform_indices = @transform_14, window_bounds = array<i64: 1, 32>}, {pipeline_mode = #tpu.pipeline_mode<synchronous>, transform_indices = @transform_15, window_bounds = array<i64: 1, 32>}, {transform_indices = @transform_16, window_bounds = array<i64: 1, 8, 32>}]} {
    %c0_i32 = arith.constant 0 : i32
    %0 = arith.cmpi eq, %arg1, %c0_i32 : i32
    %1 = arith.extui %0 : i1 to i32
    %c0_i32_0 = arith.constant 0 : i32
    %2 = arith.cmpi ne, %1, %c0_i32_0 : i32
    scf.if %2 {
      %c0_79 = arith.constant 0 : index
      %c0_80 = arith.constant 0 : index
      %c0_81 = arith.constant 0 : index
      %170 = vector.load %arg2[%c0_79, %c0_80, %c0_81] : memref<1x8x32xf32, #tpu.memory_space<vmem>>, vector<1x8x32xf32>
      %171 = vector.shape_cast %170 : vector<1x8x32xf32> to vector<8x32xf32>
      %c0_82 = arith.constant 0 : index
      %c0_83 = arith.constant 0 : index
      %172 = vector.load %arg6[%c0_82, %c0_83] : memref<32x64xf32, #tpu.memory_space<vmem>>, vector<32x64xf32>
      %cst_84 = arith.constant dense<0.000000e+00> : vector<8x64xf32>
      %173 = tpu.matmul %171, %172, %cst_84 {dimension_numbers = #tpu.dot_dimension_numbers<[1], [0], [0], [1], [0, 0, 1, 1], [], []>} : vector<8x32xf32>, vector<32x64xf32>, vector<8x64xf32> -> vector<8x64xf32>
      %c0_85 = arith.constant 0 : index
      %c0_86 = arith.constant 0 : index
      %174 = vector.load %arg7[%c0_85, %c0_86] : memref<1x64xf32, #tpu.memory_space<vmem>>, vector<1x64xf32>
      %175 = vector.broadcast %174 : vector<1x64xf32> to vector<8x64xf32>
      %176 = arith.addf %173, %175 : vector<8x64xf32>
      %c0_87 = arith.constant 0 : index
      %c0_88 = arith.constant 0 : index
      %177 = vector.load %arg19[%c0_87, %c0_88] : memref<8x64xf32, #tpu.memory_space<vmem>>, vector<8x64xf32>
      tpu.vector_store %arg19[%c0_87, %c0_88], %176 {strides = array<i32>} : memref<8x64xf32, #tpu.memory_space<vmem>>, vector<8x64xf32>,
    } else {
    }
    %c8_i32 = arith.constant 8 : i32
    %3 = arith.muli %arg1, %c8_i32 : i32
    %4 = tpu.assume_multiple %3, 8 : i32
    %c0 = arith.constant 0 : index
    %5 = arith.index_cast %4 : i32 to index
    %c0_1 = arith.constant 0 : index
    %6 = vector.load %arg2[%c0, %5, %c0_1] : memref<1x8x32xf32, #tpu.memory_space<vmem>>, vector<1x8x32xf32>
    %7 = vector.shape_cast %6 : vector<1x8x32xf32> to vector<8x32xf32>
    %c0_2 = arith.constant 0 : index
    %c0_3 = arith.constant 0 : index
    %8 = vector.load %arg4[%c0_2, %c0_3] : memref<32x32xf32, #tpu.memory_space<vmem>>, vector<32x32xf32>
    %cst = arith.constant dense<0.000000e+00> : vector<8x32xf32>
    %9 = tpu.matmul %7, %8, %cst {dimension_numbers = #tpu.dot_dimension_numbers<[1], [0], [0], [1], [0, 0, 1, 1], [], []>} : vector<8x32xf32>, vector<32x32xf32>, vector<8x32xf32> -> vector<8x32xf32>
    %c0_4 = arith.constant 0 : index
    %c0_5 = arith.constant 0 : index
    %10 = vector.load %arg5[%c0_4, %c0_5] : memref<1x32xf32, #tpu.memory_space<vmem>>, vector<1x32xf32>
    %11 = vector.broadcast %10 : vector<1x32xf32> to vector<8x32xf32>
    %12 = arith.addf %9, %11 : vector<8x32xf32>
    %c0_6 = arith.constant 0 : index
    %c0_7 = arith.constant 0 : index
    %c0_8 = arith.constant 0 : index
    %13 = vector.load %arg3[%c0_6, %c0_7, %c0_8] : memref<1x1x8xi32, #tpu.memory_space<vmem>>, vector<1x1x8xi32>
    %14 = vector.shape_cast %13 : vector<1x1x8xi32> to vector<1x8xi32>
    %15 = vector.extract_strided_slice %12 {offsets = [0, 0], sizes = [8, 8], strides = [1, 1]} : vector<8x32xf32> to vector<8x8xf32>
    %c0_9 = arith.constant 0 : index
    %c0_10 = arith.constant 0 : index
    %16 = vector.load %arg19[%c0_9, %c0_10] : memref<8x64xf32, #tpu.memory_space<vmem>>, vector<8x8xf32>
    %c0_11 = arith.constant 0 : index
    %c32 = arith.constant 32 : index
    %17 = vector.load %arg19[%c0_11, %c32] : memref<8x64xf32, #tpu.memory_space<vmem>>, vector<8x8xf32>
    "tpu.trace_start"() <{level = 10 : i32, message = "qd,kd->qk"}> : () -> ()
    %cst_12 = arith.constant dense<0.000000e+00> : vector<8x8xf32>
    %18 = tpu.matmul %15, %16, %cst_12 {dimension_numbers = #tpu.dot_dimension_numbers<[1], [1], [0], [0], [0, 0, 1, 0], [], []>} : vector<8x8xf32>, vector<8x8xf32>, vector<8x8xf32> -> vector<8x8xf32>
    %c0_i32_13 = arith.constant 0 : i32
    "tpu.trace_stop"() : () -> ()
    %19 = vector.broadcast %c0_i32_13 : i32 to vector<1x8xi32>
    %20 = arith.cmpi eq, %14, %19 : vector<1x8xi32>
    %cst_14 = arith.constant -1.000000e+10 : f32
    %21 = vector.shape_cast %20 : vector<1x8xi1> to vector<1x8xi1>
    %22 = vector.broadcast %21 : vector<1x8xi1> to vector<8x8xi1>
    %23 = vector.broadcast %cst_14 : f32 to vector<8x8xf32>
    %24 = arith.select %22, %23, %18 : vector<8x8xi1>, vector<8x8xf32>
    %cst_15 = arith.constant dense<0xFF800000> : vector<8xf32>
    %25 = vector.multi_reduction <maximumf>, %24, %cst_15 [1] : vector<8x8xf32> to vector<8xf32>
    %26 = vector.shape_cast %25 : vector<8xf32> to vector<8x1xf32>
    %27 = vector.broadcast %26 : vector<8x1xf32> to vector<8x8xf32>
    %28 = arith.subf %24, %27 : vector<8x8xf32>
    %29 = math.exp %28 : vector<8x8xf32>
    %cst_16 = arith.constant dense<0.000000e+00> : vector<8xf32>
    %30 = vector.multi_reduction <add>, %29, %cst_16 [1] : vector<8x8xf32> to vector<8xf32>
    %31 = vector.shape_cast %30 : vector<8xf32> to vector<8x1xf32>
    %32 = tpu.reciprocal %31 : vector<8x1xf32> -> vector<8x1xf32>
    %33 = vector.broadcast %32 : vector<8x1xf32> to vector<8x8xf32>
    %34 = arith.mulf %29, %33 : vector<8x8xf32>
    %cst_17 = arith.constant dense<0.000000e+00> : vector<8x8xf32>
    %35 = tpu.matmul %34, %17, %cst_17 {dimension_numbers = #tpu.dot_dimension_numbers<[1], [0], [0], [1], [0, 0, 1, 1], [], []>} : vector<8x8xf32>, vector<8x8xf32>, vector<8x8xf32> -> vector<8x8xf32>
    %36 = vector.extract_strided_slice %12 {offsets = [0, 8], sizes = [8, 8], strides = [1, 1]} : vector<8x32xf32> to vector<8x8xf32>
    %c0_18 = arith.constant 0 : index
    %c8 = arith.constant 8 : index
    %37 = vector.load %arg19[%c0_18, %c8] : memref<8x64xf32, #tpu.memory_space<vmem>>, vector<8x8xf32>
    %c0_19 = arith.constant 0 : index
    %c40 = arith.constant 40 : index
    %38 = vector.load %arg19[%c0_19, %c40] : memref<8x64xf32, #tpu.memory_space<vmem>>, vector<8x8xf32>
    "tpu.trace_start"() <{level = 10 : i32, message = "qd,kd->qk"}> : () -> ()
    %cst_20 = arith.constant dense<0.000000e+00> : vector<8x8xf32>
    %39 = tpu.matmul %36, %37, %cst_20 {dimension_numbers = #tpu.dot_dimension_numbers<[1], [1], [0], [0], [0, 0, 1, 0], [], []>} : vector<8x8xf32>, vector<8x8xf32>, vector<8x8xf32> -> vector<8x8xf32>
    %c0_i32_21 = arith.constant 0 : i32
    "tpu.trace_stop"() : () -> ()
    %40 = vector.broadcast %c0_i32_21 : i32 to vector<1x8xi32>
    %41 = arith.cmpi eq, %14, %40 : vector<1x8xi32>
    %cst_22 = arith.constant -1.000000e+10 : f32
    %42 = vector.shape_cast %41 : vector<1x8xi1> to vector<1x8xi1>
    %43 = vector.broadcast %42 : vector<1x8xi1> to vector<8x8xi1>
    %44 = vector.broadcast %cst_22 : f32 to vector<8x8xf32>
    %45 = arith.select %43, %44, %39 : vector<8x8xi1>, vector<8x8xf32>
    %cst_23 = arith.constant dense<0xFF800000> : vector<8xf32>
    %46 = vector.multi_reduction <maximumf>, %45, %cst_23 [1] : vector<8x8xf32> to vector<8xf32>
    %47 = vector.shape_cast %46 : vector<8xf32> to vector<8x1xf32>
    %48 = vector.broadcast %47 : vector<8x1xf32> to vector<8x8xf32>
    %49 = arith.subf %45, %48 : vector<8x8xf32>
    %50 = math.exp %49 : vector<8x8xf32>
    %cst_24 = arith.constant dense<0.000000e+00> : vector<8xf32>
    %51 = vector.multi_reduction <add>, %50, %cst_24 [1] : vector<8x8xf32> to vector<8xf32>
    %52 = vector.shape_cast %51 : vector<8xf32> to vector<8x1xf32>
    %53 = tpu.reciprocal %52 : vector<8x1xf32> -> vector<8x1xf32>
    %54 = vector.broadcast %53 : vector<8x1xf32> to vector<8x8xf32>
    %55 = arith.mulf %50, %54 : vector<8x8xf32>
    %cst_25 = arith.constant dense<0.000000e+00> : vector<8x8xf32>
    %56 = tpu.matmul %55, %38, %cst_25 {dimension_numbers = #tpu.dot_dimension_numbers<[1], [0], [0], [1], [0, 0, 1, 1], [], []>} : vector<8x8xf32>, vector<8x8xf32>, vector<8x8xf32> -> vector<8x8xf32>
    %57 = vector.extract_strided_slice %12 {offsets = [0, 16], sizes = [8, 8], strides = [1, 1]} : vector<8x32xf32> to vector<8x8xf32>
    %c0_26 = arith.constant 0 : index
    %c16 = arith.constant 16 : index
    %58 = vector.load %arg19[%c0_26, %c16] : memref<8x64xf32, #tpu.memory_space<vmem>>, vector<8x8xf32>
    %c0_27 = arith.constant 0 : index
    %c48 = arith.constant 48 : index
    %59 = vector.load %arg19[%c0_27, %c48] : memref<8x64xf32, #tpu.memory_space<vmem>>, vector<8x8xf32>
    "tpu.trace_start"() <{level = 10 : i32, message = "qd,kd->qk"}> : () -> ()
    %cst_28 = arith.constant dense<0.000000e+00> : vector<8x8xf32>
    %60 = tpu.matmul %57, %58, %cst_28 {dimension_numbers = #tpu.dot_dimension_numbers<[1], [1], [0], [0], [0, 0, 1, 0], [], []>} : vector<8x8xf32>, vector<8x8xf32>, vector<8x8xf32> -> vector<8x8xf32>
    %c0_i32_29 = arith.constant 0 : i32
    "tpu.trace_stop"() : () -> ()
    %61 = vector.broadcast %c0_i32_29 : i32 to vector<1x8xi32>
    %62 = arith.cmpi eq, %14, %61 : vector<1x8xi32>
    %cst_30 = arith.constant -1.000000e+10 : f32
    %63 = vector.shape_cast %62 : vector<1x8xi1> to vector<1x8xi1>
    %64 = vector.broadcast %63 : vector<1x8xi1> to vector<8x8xi1>
    %65 = vector.broadcast %cst_30 : f32 to vector<8x8xf32>
    %66 = arith.select %64, %65, %60 : vector<8x8xi1>, vector<8x8xf32>
    %cst_31 = arith.constant dense<0xFF800000> : vector<8xf32>
    %67 = vector.multi_reduction <maximumf>, %66, %cst_31 [1] : vector<8x8xf32> to vector<8xf32>
    %68 = vector.shape_cast %67 : vector<8xf32> to vector<8x1xf32>
    %69 = vector.broadcast %68 : vector<8x1xf32> to vector<8x8xf32>
    %70 = arith.subf %66, %69 : vector<8x8xf32>
    %71 = math.exp %70 : vector<8x8xf32>
    %cst_32 = arith.constant dense<0.000000e+00> : vector<8xf32>
    %72 = vector.multi_reduction <add>, %71, %cst_32 [1] : vector<8x8xf32> to vector<8xf32>
    %73 = vector.shape_cast %72 : vector<8xf32> to vector<8x1xf32>
    %74 = tpu.reciprocal %73 : vector<8x1xf32> -> vector<8x1xf32>
    %75 = vector.broadcast %74 : vector<8x1xf32> to vector<8x8xf32>
    %76 = arith.mulf %71, %75 : vector<8x8xf32>
    %cst_33 = arith.constant dense<0.000000e+00> : vector<8x8xf32>
    %77 = tpu.matmul %76, %59, %cst_33 {dimension_numbers = #tpu.dot_dimension_numbers<[1], [0], [0], [1], [0, 0, 1, 1], [], []>} : vector<8x8xf32>, vector<8x8xf32>, vector<8x8xf32> -> vector<8x8xf32>
    %78 = vector.extract_strided_slice %12 {offsets = [0, 24], sizes = [8, 8], strides = [1, 1]} : vector<8x32xf32> to vector<8x8xf32>
    %c0_34 = arith.constant 0 : index
    %c24 = arith.constant 24 : index
    %79 = vector.load %arg19[%c0_34, %c24] : memref<8x64xf32, #tpu.memory_space<vmem>>, vector<8x8xf32>
    %c0_35 = arith.constant 0 : index
    %c56 = arith.constant 56 : index
    %80 = vector.load %arg19[%c0_35, %c56] : memref<8x64xf32, #tpu.memory_space<vmem>>, vector<8x8xf32>
    "tpu.trace_start"() <{level = 10 : i32, message = "qd,kd->qk"}> : () -> ()
    %cst_36 = arith.constant dense<0.000000e+00> : vector<8x8xf32>
    %81 = tpu.matmul %78, %79, %cst_36 {dimension_numbers = #tpu.dot_dimension_numbers<[1], [1], [0], [0], [0, 0, 1, 0], [], []>} : vector<8x8xf32>, vector<8x8xf32>, vector<8x8xf32> -> vector<8x8xf32>
    %c0_i32_37 = arith.constant 0 : i32
    "tpu.trace_stop"() : () -> ()
    %82 = vector.broadcast %c0_i32_37 : i32 to vector<1x8xi32>
    %83 = arith.cmpi eq, %14, %82 : vector<1x8xi32>
    %cst_38 = arith.constant -1.000000e+10 : f32
    %84 = vector.shape_cast %83 : vector<1x8xi1> to vector<1x8xi1>
    %85 = vector.broadcast %84 : vector<1x8xi1> to vector<8x8xi1>
    %86 = vector.broadcast %cst_38 : f32 to vector<8x8xf32>
    %87 = arith.select %85, %86, %81 : vector<8x8xi1>, vector<8x8xf32>
    %cst_39 = arith.constant dense<0xFF800000> : vector<8xf32>
    %88 = vector.multi_reduction <maximumf>, %87, %cst_39 [1] : vector<8x8xf32> to vector<8xf32>
    %89 = vector.shape_cast %88 : vector<8xf32> to vector<8x1xf32>
    %90 = vector.broadcast %89 : vector<8x1xf32> to vector<8x8xf32>
    %91 = arith.subf %87, %90 : vector<8x8xf32>
    %92 = math.exp %91 : vector<8x8xf32>
    %cst_40 = arith.constant dense<0.000000e+00> : vector<8xf32>
    %93 = vector.multi_reduction <add>, %92, %cst_40 [1] : vector<8x8xf32> to vector<8xf32>
    %94 = vector.shape_cast %93 : vector<8xf32> to vector<8x1xf32>
    %95 = tpu.reciprocal %94 : vector<8x1xf32> -> vector<8x1xf32>
    %96 = vector.broadcast %95 : vector<8x1xf32> to vector<8x8xf32>
    %97 = arith.mulf %92, %96 : vector<8x8xf32>
    %cst_41 = arith.constant dense<0.000000e+00> : vector<8x8xf32>
    %98 = tpu.matmul %97, %80, %cst_41 {dimension_numbers = #tpu.dot_dimension_numbers<[1], [0], [0], [1], [0, 0, 1, 1], [], []>} : vector<8x8xf32>, vector<8x8xf32>, vector<8x8xf32> -> vector<8x8xf32>
    %99 = tpu.concatenate %35, %56, %77, %98 in 1 : vector<8x8xf32>, vector<8x8xf32>, vector<8x8xf32>, vector<8x8xf32> -> vector<8x32xf32>
    %c0_42 = arith.constant 0 : index
    %c0_43 = arith.constant 0 : index
    %100 = vector.load %arg8[%c0_42, %c0_43] : memref<32x32xf32, #tpu.memory_space<vmem>>, vector<32x32xf32>
    %cst_44 = arith.constant dense<0.000000e+00> : vector<8x32xf32>
    %101 = tpu.matmul %99, %100, %cst_44 {dimension_numbers = #tpu.dot_dimension_numbers<[1], [0], [0], [1], [0, 0, 1, 1], [], []>} : vector<8x32xf32>, vector<32x32xf32>, vector<8x32xf32> -> vector<8x32xf32>
    %c0_45 = arith.constant 0 : index
    %c0_46 = arith.constant 0 : index
    %102 = vector.load %arg9[%c0_45, %c0_46] : memref<1x32xf32, #tpu.memory_space<vmem>>, vector<1x32xf32>
    %103 = vector.broadcast %102 : vector<1x32xf32> to vector<8x32xf32>
    %104 = arith.addf %101, %103 : vector<8x32xf32>
    %105 = arith.addf %7, %104 : vector<8x32xf32>
    %cst_47 = arith.constant dense<0.000000e+00> : vector<8xf32>
    %106 = vector.multi_reduction <add>, %105, %cst_47 [1] : vector<8x32xf32> to vector<8xf32>
    %107 = vector.shape_cast %106 : vector<8xf32> to vector<8x1xf32>
    %cst_48 = arith.constant 3.200000e+01 : f32
    %108 = vector.broadcast %cst_48 : f32 to vector<8x1xf32>
    %109 = arith.divf %107, %108 : vector<8x1xf32>
    %110 = vector.broadcast %109 : vector<8x1xf32> to vector<8x32xf32>
    %111 = arith.subf %105, %110 : vector<8x32xf32>
    %112 = arith.mulf %111, %111 : vector<8x32xf32>
    %cst_49 = arith.constant dense<0.000000e+00> : vector<8xf32>
    %113 = vector.multi_reduction <add>, %112, %cst_49 [1] : vector<8x32xf32> to vector<8xf32>
    %114 = vector.shape_cast %113 : vector<8xf32> to vector<8x1xf32>
    %cst_50 = arith.constant 3.200000e+01 : f32
    %115 = vector.broadcast %cst_50 : f32 to vector<8x1xf32>
    %116 = arith.divf %114, %115 : vector<8x1xf32>
    %117 = vector.broadcast %109 : vector<8x1xf32> to vector<8x32xf32>
    %118 = arith.subf %105, %117 : vector<8x32xf32>
    %cst_51 = arith.constant 9.99999974E-6 : f32
    %119 = vector.broadcast %cst_51 : f32 to vector<8x1xf32>
    %120 = arith.addf %116, %119 : vector<8x1xf32>
    %121 = math.rsqrt %120 : vector<8x1xf32>
    %122 = vector.broadcast %121 : vector<8x1xf32> to vector<8x32xf32>
    %123 = arith.mulf %118, %122 : vector<8x32xf32>
    %c0_52 = arith.constant 0 : index
    %c0_53 = arith.constant 0 : index
    %124 = vector.load %arg10[%c0_52, %c0_53] : memref<1x32xf32, #tpu.memory_space<vmem>>, vector<1x32xf32>
    %125 = vector.broadcast %124 : vector<1x32xf32> to vector<8x32xf32>
    %126 = arith.mulf %123, %125 : vector<8x32xf32>
    %c0_54 = arith.constant 0 : index
    %c0_55 = arith.constant 0 : index
    %127 = vector.load %arg11[%c0_54, %c0_55] : memref<1x32xf32, #tpu.memory_space<vmem>>, vector<1x32xf32>
    %128 = vector.broadcast %127 : vector<1x32xf32> to vector<8x32xf32>
    %129 = arith.addf %126, %128 : vector<8x32xf32>
    %c0_56 = arith.constant 0 : index
    %c0_57 = arith.constant 0 : index
    %130 = vector.load %arg12[%c0_56, %c0_57] : memref<32x64xf32, #tpu.memory_space<vmem>>, vector<32x64xf32>
    %cst_58 = arith.constant dense<0.000000e+00> : vector<8x64xf32>
    %131 = tpu.matmul %129, %130, %cst_58 {dimension_numbers = #tpu.dot_dimension_numbers<[1], [0], [0], [1], [0, 0, 1, 1], [], []>} : vector<8x32xf32>, vector<32x64xf32>, vector<8x64xf32> -> vector<8x64xf32>
    %c0_59 = arith.constant 0 : index
    %c0_60 = arith.constant 0 : index
    %132 = vector.load %arg13[%c0_59, %c0_60] : memref<1x64xf32, #tpu.memory_space<vmem>>, vector<1x64xf32>
    %133 = vector.broadcast %132 : vector<1x64xf32> to vector<8x64xf32>
    %134 = arith.addf %131, %133 : vector<8x64xf32>
    %cst_61 = arith.constant 0.000000e+00 : f32
    %135 = vector.broadcast %cst_61 : f32 to vector<8x64xf32>
    %136 = arith.maximumf %134, %135 : vector<8x64xf32>
    %c0_62 = arith.constant 0 : index
    %c0_63 = arith.constant 0 : index
    %137 = vector.load %arg14[%c0_62, %c0_63] : memref<64x32xf32, #tpu.memory_space<vmem>>, vector<64x32xf32>
    %cst_64 = arith.constant dense<0.000000e+00> : vector<8x32xf32>
    %138 = tpu.matmul %136, %137, %cst_64 {dimension_numbers = #tpu.dot_dimension_numbers<[1], [0], [0], [1], [0, 0, 1, 1], [], []>} : vector<8x64xf32>, vector<64x32xf32>, vector<8x32xf32> -> vector<8x32xf32>
    %c0_65 = arith.constant 0 : index
    %c0_66 = arith.constant 0 : index
    %139 = vector.load %arg15[%c0_65, %c0_66] : memref<1x32xf32, #tpu.memory_space<vmem>>, vector<1x32xf32>
    %140 = vector.broadcast %139 : vector<1x32xf32> to vector<8x32xf32>
    %141 = arith.addf %138, %140 : vector<8x32xf32>
    %142 = arith.addf %129, %141 : vector<8x32xf32>
    %cst_67 = arith.constant dense<0.000000e+00> : vector<8xf32>
    %143 = vector.multi_reduction <add>, %142, %cst_67 [1] : vector<8x32xf32> to vector<8xf32>
    %144 = vector.shape_cast %143 : vector<8xf32> to vector<8x1xf32>
    %cst_68 = arith.constant 3.200000e+01 : f32
    %145 = vector.broadcast %cst_68 : f32 to vector<8x1xf32>
    %146 = arith.divf %144, %145 : vector<8x1xf32>
    %147 = vector.broadcast %146 : vector<8x1xf32> to vector<8x32xf32>
    %148 = arith.subf %142, %147 : vector<8x32xf32>
    %149 = arith.mulf %148, %148 : vector<8x32xf32>
    %cst_69 = arith.constant dense<0.000000e+00> : vector<8xf32>
    %150 = vector.multi_reduction <add>, %149, %cst_69 [1] : vector<8x32xf32> to vector<8xf32>
    %151 = vector.shape_cast %150 : vector<8xf32> to vector<8x1xf32>
    %cst_70 = arith.constant 3.200000e+01 : f32
    %152 = vector.broadcast %cst_70 : f32 to vector<8x1xf32>
    %153 = arith.divf %151, %152 : vector<8x1xf32>
    %154 = vector.broadcast %146 : vector<8x1xf32> to vector<8x32xf32>
    %155 = arith.subf %142, %154 : vector<8x32xf32>
    %cst_71 = arith.constant 9.99999974E-6 : f32
    %156 = vector.broadcast %cst_71 : f32 to vector<8x1xf32>
    %157 = arith.addf %153, %156 : vector<8x1xf32>
    %158 = math.rsqrt %157 : vector<8x1xf32>
    %159 = vector.broadcast %158 : vector<8x1xf32> to vector<8x32xf32>
    %160 = arith.mulf %155, %159 : vector<8x32xf32>
    %c0_72 = arith.constant 0 : index
    %c0_73 = arith.constant 0 : index
    %161 = vector.load %arg16[%c0_72, %c0_73] : memref<1x32xf32, #tpu.memory_space<vmem>>, vector<1x32xf32>
    %162 = vector.broadcast %161 : vector<1x32xf32> to vector<8x32xf32>
    %163 = arith.mulf %160, %162 : vector<8x32xf32>
    %c0_74 = arith.constant 0 : index
    %c0_75 = arith.constant 0 : index
    %164 = vector.load %arg17[%c0_74, %c0_75] : memref<1x32xf32, #tpu.memory_space<vmem>>, vector<1x32xf32>
    %165 = vector.broadcast %164 : vector<1x32xf32> to vector<8x32xf32>
    %166 = arith.addf %163, %165 : vector<8x32xf32>
    %c0_76 = arith.constant 0 : index
    %c0_77 = arith.constant 0 : index
    %c0_78 = arith.constant 0 : index
    %167 = vector.load %arg18[%c0_76, %c0_77, %c0_78] : memref<1x8x32xf32, #tpu.memory_space<vmem>>, vector<1x8x32xf32>
    %168 = vector.shape_cast %167 : vector<1x8x32xf32> to vector<8x32xf32>
    %169 = vector.shape_cast %166 : vector<8x32xf32> to vector<1x8x32xf32>
    tpu.vector_store %arg18[%c0_76, %c0_77, %c0_78], %169 {strides = array<i32>} : memref<1x8x32xf32, #tpu.memory_space<vmem>>, vector<1x8x32xf32>,
    return
  }
  func.func @transform_0(%arg0: i32, %arg1: i32) -> (i32, i32, i32) {
    %c0_i32 = arith.constant 0 : i32
    %c0_i32_0 = arith.constant 0 : i32
    %c0_i32_1 = arith.constant 0 : i32
    return %arg0, %c0_i32, %c0_i32_0 : i32, i32, i32
  }
  func.func @transform_1(%arg0: i32, %arg1: i32) -> (i32, i32, i32) {
    %c0_i32 = arith.constant 0 : i32
    %c0_i32_0 = arith.constant 0 : i32
    %c0_i32_1 = arith.constant 0 : i32
    return %arg0, %c0_i32, %c0_i32_0 : i32, i32, i32
  }
  func.func @transform_2(%arg0: i32, %arg1: i32) -> (i32, i32) {
    %c0_i32 = arith.constant 0 : i32
    %c0_i32_0 = arith.constant 0 : i32
    %c0_i32_1 = arith.constant 0 : i32
    return %c0_i32, %c0_i32_0 : i32, i32
  }
  func.func @transform_3(%arg0: i32, %arg1: i32) -> (i32, i32) {
    %c0_i32 = arith.constant 0 : i32
    %c0_i32_0 = arith.constant 0 : i32
    %c0_i32_1 = arith.constant 0 : i32
    return %c0_i32, %c0_i32_0 : i32, i32
  }
  func.func @transform_4(%arg0: i32, %arg1: i32) -> (i32, i32) {
    %c0_i32 = arith.constant 0 : i32
    %c0_i32_0 = arith.constant 0 : i32
    %c0_i32_1 = arith.constant 0 : i32
    return %c0_i32, %c0_i32_0 : i32, i32
  }
  func.func @transform_5(%arg0: i32, %arg1: i32) -> (i32, i32) {
    %c0_i32 = arith.constant 0 : i32
    %c0_i32_0 = arith.constant 0 : i32
    %c0_i32_1 = arith.constant 0 : i32
    return %c0_i32, %c0_i32_0 : i32, i32
  }
  func.func @transform_6(%arg0: i32, %arg1: i32) -> (i32, i32) {
    %c0_i32 = arith.constant 0 : i32
    %c0_i32_0 = arith.constant 0 : i32
    %c0_i32_1 = arith.constant 0 : i32
    return %c0_i32, %c0_i32_0 : i32, i32
  }
  func.func @transform_7(%arg0: i32, %arg1: i32) -> (i32, i32) {
    %c0_i32 = arith.constant 0 : i32
    %c0_i32_0 = arith.constant 0 : i32
    %c0_i32_1 = arith.constant 0 : i32
    return %c0_i32, %c0_i32_0 : i32, i32
  }
  func.func @transform_8(%arg0: i32, %arg1: i32) -> (i32, i32) {
    %c0_i32 = arith.constant 0 : i32
    %c0_i32_0 = arith.constant 0 : i32
    %c0_i32_1 = arith.constant 0 : i32
    return %c0_i32, %c0_i32_0 : i32, i32
  }
  func.func @transform_9(%arg0: i32, %arg1: i32) -> (i32, i32) {
    %c0_i32 = arith.constant 0 : i32
    %c0_i32_0 = arith.constant 0 : i32
    %c0_i32_1 = arith.constant 0 : i32
    return %c0_i32, %c0_i32_0 : i32, i32
  }
  func.func @transform_10(%arg0: i32, %arg1: i32) -> (i32, i32) {
    %c0_i32 = arith.constant 0 : i32
    %c0_i32_0 = arith.constant 0 : i32
    %c0_i32_1 = arith.constant 0 : i32
    return %c0_i32, %c0_i32_0 : i32, i32
  }
  func.func @transform_11(%arg0: i32, %arg1: i32) -> (i32, i32) {
    %c0_i32 = arith.constant 0 : i32
    %c0_i32_0 = arith.constant 0 : i32
    %c0_i32_1 = arith.constant 0 : i32
    return %c0_i32, %c0_i32_0 : i32, i32
  }
  func.func @transform_12(%arg0: i32, %arg1: i32) -> (i32, i32) {
    %c0_i32 = arith.constant 0 : i32
    %c0_i32_0 = arith.constant 0 : i32
    %c0_i32_1 = arith.constant 0 : i32
    return %c0_i32, %c0_i32_0 : i32, i32
  }
  func.func @transform_13(%arg0: i32, %arg1: i32) -> (i32, i32) {
    %c0_i32 = arith.constant 0 : i32
    %c0_i32_0 = arith.constant 0 : i32
    %c0_i32_1 = arith.constant 0 : i32
    return %c0_i32, %c0_i32_0 : i32, i32
  }
  func.func @transform_14(%arg0: i32, %arg1: i32) -> (i32, i32) {
    %c0_i32 = arith.constant 0 : i32
    %c0_i32_0 = arith.constant 0 : i32
    %c0_i32_1 = arith.constant 0 : i32
    return %c0_i32, %c0_i32_0 : i32, i32
  }
  func.func @transform_15(%arg0: i32, %arg1: i32) -> (i32, i32) {
    %c0_i32 = arith.constant 0 : i32
    %c0_i32_0 = arith.constant 0 : i32
    %c0_i32_1 = arith.constant 0 : i32
    return %c0_i32, %c0_i32_0 : i32, i32
  }
  func.func @transform_16(%arg0: i32, %arg1: i32) -> (i32, i32, i32) {
    %c0_i32 = arith.constant 0 : i32
    %c0_i32_0 = arith.constant 0 : i32
    return %arg0, %arg1, %c0_i32 : i32, i32, i32
  }
}

</mosaic_0001>

<llo_original>
// kernel: tpu_custom_call.1
$region0: #{tpu_custom_call.1}
  #allocation0 [shape = 'u32[]', space=smem, size = 0x4, offset = 0x4, fixed_abs, tag = 'smem constant byte address 0x4 - core index']
  #allocation1 [shape = 'u32[144,128]{1,0:T(1,128)}', space=vmem, size = 0x12000, scoped, tag = 'internal scratch']
  #allocation2 [shape = 'f32[8,64]{1,0:T(8,128)}', space=vmem, size = 0x1000, scoped, tag = 'scratch operand']
  %s0 = inlined_call_operand.hbm [shape: f32[2,8,32], index: 0, kind: input, shape index: {}]
  %s1 = inlined_call_operand.vmem [shape: s32[2,1,8], index: 1, kind: input, shape index: {}]
  %s2 = inlined_call_operand.vmem [shape: f32[32,32], index: 2, kind: input, shape index: {}]
  %s3 = inlined_call_operand.vmem [shape: f32[1,32], index: 3, kind: input, shape index: {}]
  %s4 = inlined_call_operand.vmem [shape: f32[32,64], index: 4, kind: input, shape index: {}]
  %s5 = inlined_call_operand.vmem [shape: f32[1,64], index: 5, kind: input, shape index: {}]
  %s6 = inlined_call_operand.vmem [shape: f32[32,32], index: 6, kind: input, shape index: {}]
  %s7 = inlined_call_operand.vmem [shape: f32[1,32], index: 7, kind: input, shape index: {}]
  %s8 = inlined_call_operand.vmem [shape: f32[1,32], index: 8, kind: input, shape index: {}]
  %s9 = inlined_call_operand.vmem [shape: f32[1,32], index: 9, kind: input, shape index: {}]
  %s10 = inlined_call_operand.hbm [shape: f32[32,64], index: 10, kind: input, shape index: {}]
  %s11 = inlined_call_operand.vmem [shape: f32[1,64], index: 11, kind: input, shape index: {}]
  %s12 = inlined_call_operand.vmem [shape: f32[64,32], index: 12, kind: input, shape index: {}]
  %s13 = inlined_call_operand.vmem [shape: f32[1,32], index: 13, kind: input, shape index: {}]
  %s14 = inlined_call_operand.vmem [shape: f32[1,32], index: 14, kind: input, shape index: {}]
  %s15 = inlined_call_operand.vmem [shape: f32[1,32], index: 15, kind: input, shape index: {}]
  %s16 = inlined_call_operand.hbm [shape: f32[2,8,32], index: 16, kind: output, shape index: {}]
  %s17 = sld [smem:[#allocation0]]
  $region109: #{tpu_custom_call.1} parent=0
    _
  %s19 = ssub.s32 1, %s17
  %s20 = scalar_select 0, %s19, %s17
  $region1: #{tpu_custom_call.1} parent=0
    #allocation3 [shape = 'u8[8192]{0}', space=vmem, size = 0x2000, scoped, tag = 'input window, operand 0']
    #allocation4 [shape = 's32[2]{0}', space=sflag, size = 0x8, scoped, tag = 'scoped memory for tpu_custom_call.1']
    #allocation5 [shape = 's32[2]{0}', space=sflag, size = 0x8, scoped, tag = 'scoped memory for tpu_custom_call.1']
    #allocation6 [shape = 'u8[16384]{0}', space=vmem, size = 0x4000, scoped, tag = 'input window, operand 10, single buffered']
    #allocation7 [shape = 's32[1]{0}', space=sflag, size = 0x4, scoped, tag = 'scoped memory for tpu_custom_call.1']
    #allocation8 [shape = 'u8[8192]{0}', space=vmem, size = 0x2000, scoped, tag = 'output window, operand 0']
    %21 = vsyncpa [#allocation4], 0
    %s22 = scalar_lea.sflag [#allocation4], 1
    %23 = vsyncpa %s22, 0
    %24 = vsyncpa [#allocation7], 0
    %25 = vsyncpa [#allocation5], 0
    %s26 = scalar_lea.sflag [#allocation5], 1
    %27 = vsyncpa %s26, 0
    loop: start=0, step=1, limit=4
    $region2: #{tpu_custom_call.1} parent=1 // loop_pre_header
      _
    $region3: #{tpu_custom_call.1} parent=1 // loop_header
      %s29 = sphi 0, %s33
      %p30 = scmp.ge.s32.totalorder %s29, 4
      %s36 = sphi 0, %s48
      %s37 = sphi 0, %s44
      %s38 = sphi 0, %s36
      %s39 = sphi 0, %s37
      %s40 = sphi 0, %s38
      %s41 = sphi 0, %s39
      %s51 = sphi 0, %s53
      %s54 = sphi 0, %s51
      %s55 = sphi 0, %s54
      %s71 = sphi 0, %s55
      %s77 = sphi 0, %s79
      %s80 = sphi 0, %s77
      %s81 = sphi 0, %s80
      %s97 = sphi 0, %s81
      %s101 = sphi 0, %s101
      %s103 = sphi 0, %s101
      %s104 = sphi 0, %s103
      %s118 = sphi 0, %s104
      %s122 = sphi 0, %s122
      %s124 = sphi 0, %s122
      %s125 = sphi 0, %s124
      %s139 = sphi 0, %s125
      %s143 = sphi 0, %s143
      %s145 = sphi 0, %s143
      %s146 = sphi 0, %s145
      %s160 = sphi 0, %s146
      %s164 = sphi 0, %s164
      %s166 = sphi 0, %s164
      %s167 = sphi 0, %s166
      %s181 = sphi 0, %s167
      %s185 = sphi 0, %s185
      %s187 = sphi 0, %s185
      %s188 = sphi 0, %s187
      %s202 = sphi 0, %s188
      %s206 = sphi 0, %s206
      %s208 = sphi 0, %s206
      %s209 = sphi 0, %s208
      %s223 = sphi 0, %s209
      %s227 = sphi 0, %s227
      %s229 = sphi 0, %s227
      %s230 = sphi 0, %s229
      %s244 = sphi 0, %s230
      %s248 = sphi 0, %s248
      %s250 = sphi 0, %s248
      %s251 = sphi 0, %s250
      %s265 = sphi 0, %s251
      %s269 = sphi 0, %s269
      %s271 = sphi 0, %s269
      %s272 = sphi 0, %s271
      %s286 = sphi 0, %s272
      %s290 = sphi 0, %s290
      %s292 = sphi 0, %s290
      %s293 = sphi 0, %s292
      %s307 = sphi 0, %s293
      %s311 = sphi 0, %s311
      %s313 = sphi 0, %s311
      %s314 = sphi 0, %s313
      %s328 = sphi 0, %s314
      %s332 = sphi 0, %s332
      %s334 = sphi 0, %s332
      %s335 = sphi 0, %s334
      %s349 = sphi 0, %s335
      %s353 = sphi 0, %s353
      %s355 = sphi 0, %s353
      %s356 = sphi 0, %s355
      %s370 = sphi 0, %s356
      %s374 = sphi 0, %s374
      %s376 = sphi 0, %s374
      %s377 = sphi 0, %s376
      %s391 = sphi 0, %s377
      %s399 = sphi 0, %s401
      %s402 = sphi 0, %s399
      %s403 = sphi 0, %s402
      %s419 = sphi 0, %s403
    $region4: #{tpu_custom_call.1} parent=1 // loop_header_branch
      %32 = sbr.rel (%p30) target = $region8
    $region5: #{tpu_custom_call.1} parent=1 // loop_body
      %s34 = ssub.s32 %s29, 1
      %s35 = ssub.s32 %s29, 2
      %s42 = sadd.s32 1, %s37
      %p43 = scmp.ge.s32.totalorder %s42, 1
      %s44 = scalar_select %p43, 0, %s42
      %s45 = sadd.s32 1, %s36
      %s46 = scalar_select %p43, %s45, %s36
      %p47 = scmp.ge.s32.totalorder %s46, 2
      %s48 = scalar_select %p47, 0, %s46
      %s49 = ssub.s32 %s36, %s48
      %p50 = scmp.eq.s32.totalorder %s49, 0
      %s52 = sadd.s32 %s51, 1
      %s53 = scalar_select %p50, %s51, %s52
      %p56 = pneg %p50
      %p57 = scmp.eq.s32.totalorder %s29, 1
      %p58 = por %p56, %p57
      %p59 = scmp.ne.s32.totalorder %s51, %s54
      %p60 = scmp.eq.s32.totalorder %s29, 0
      %p61 = por %p59, %p60
      %p62 = scmp.ne.s32.totalorder %s51, %s54
      %p63 = scmp.eq.s32.totalorder %s34, 1
      %p64 = por %p62, %p63
      %p65 = scmp.ne.s32.totalorder %s54, %s55
      %p66 = scmp.eq.s32.totalorder %s34, 0
      %p67 = por %p65, %p66
      %p68 = scmp.ne.s32.totalorder %s54, %s55
      %p69 = scmp.eq.s32.totalorder %s35, 1
      %p70 = por %p68, %p69
      %p72 = scmp.ne.s32.totalorder %s55, %s71
      %p73 = scmp.eq.s32.totalorder %s35, 0
      %p74 = por %p72, %p73
      %s75 = ssub.s32 %s36, %s48
      %p76 = scmp.eq.s32.totalorder %s75, 0
      %s78 = sadd.s32 %s77, 1
      %s79 = scalar_select %p76, %s77, %s78
      %p82 = pneg %p76
      %p83 = scmp.eq.s32.totalorder %s29, 1
      %p84 = por %p82, %p83
      %p85 = scmp.ne.s32.totalorder %s77, %s80
      %p86 = scmp.eq.s32.totalorder %s29, 0
      %p87 = por %p85, %p86
      %p88 = scmp.ne.s32.totalorder %s77, %s80
      %p89 = scmp.eq.s32.totalorder %s34, 1
      %p90 = por %p88, %p89
      %p91 = scmp.ne.s32.totalorder %s80, %s81
      %p92 = scmp.eq.s32.totalorder %s34, 0
      %p93 = por %p91, %p92
      %p94 = scmp.ne.s32.totalorder %s80, %s81
      %p95 = scmp.eq.s32.totalorder %s35, 1
      %p96 = por %p94, %p95
      %p98 = scmp.ne.s32.totalorder %s81, %s97
      %p99 = scmp.eq.s32.totalorder %s35, 0
      %p100 = por %p98, %p99
      %s102 = sadd.s32 %s101, 1
      %p105 = scmp.eq.s32.totalorder %s29, 1
      %p106 = scmp.ne.s32.totalorder %s101, %s103
      %p107 = scmp.eq.s32.totalorder %s29, 0
      %p108 = por %p106, %p107
      %p109 = scmp.ne.s32.totalorder %s101, %s103
      %p110 = scmp.eq.s32.totalorder %s34, 1
      %p111 = por %p109, %p110
      %p112 = scmp.ne.s32.totalorder %s103, %s104
      %p113 = scmp.eq.s32.totalorder %s34, 0
      %p114 = por %p112, %p113
      %p115 = scmp.ne.s32.totalorder %s103, %s104
      %p116 = scmp.eq.s32.totalorder %s35, 1
      %p117 = por %p115, %p116
      %p119 = scmp.ne.s32.totalorder %s104, %s118
      %p120 = scmp.eq.s32.totalorder %s35, 0
      %p121 = por %p119, %p120
      %s123 = sadd.s32 %s122, 1
      %p126 = scmp.eq.s32.totalorder %s29, 1
      %p127 = scmp.ne.s32.totalorder %s122, %s124
      %p128 = scmp.eq.s32.totalorder %s29, 0
      %p129 = por %p127, %p128
      %p130 = scmp.ne.s32.totalorder %s122, %s124
      %p131 = scmp.eq.s32.totalorder %s34, 1
      %p132 = por %p130, %p131
      %p133 = scmp.ne.s32.totalorder %s124, %s125
      %p134 = scmp.eq.s32.totalorder %s34, 0
      %p135 = por %p133, %p134
      %p136 = scmp.ne.s32.totalorder %s124, %s125
      %p137 = scmp.eq.s32.totalorder %s35, 1
      %p138 = por %p136, %p137
      %p140 = scmp.ne.s32.totalorder %s125, %s139
      %p141 = scmp.eq.s32.totalorder %s35, 0
      %p142 = por %p140, %p141
      %s144 = sadd.s32 %s143, 1
      %p147 = scmp.eq.s32.totalorder %s29, 1
      %p148 = scmp.ne.s32.totalorder %s143, %s145
      %p149 = scmp.eq.s32.totalorder %s29, 0
      %p150 = por %p148, %p149
      %p151 = scmp.ne.s32.totalorder %s143, %s145
      %p152 = scmp.eq.s32.totalorder %s34, 1
      %p153 = por %p151, %p152
      %p154 = scmp.ne.s32.totalorder %s145, %s146
      %p155 = scmp.eq.s32.totalorder %s34, 0
      %p156 = por %p154, %p155
      %p157 = scmp.ne.s32.totalorder %s145, %s146
      %p158 = scmp.eq.s32.totalorder %s35, 1
      %p159 = por %p157, %p158
      %p161 = scmp.ne.s32.totalorder %s146, %s160
      %p162 = scmp.eq.s32.totalorder %s35, 0
      %p163 = por %p161, %p162
      %s165 = sadd.s32 %s164, 1
      %p168 = scmp.eq.s32.totalorder %s29, 1
      %p169 = scmp.ne.s32.totalorder %s164, %s166
      %p170 = scmp.eq.s32.totalorder %s29, 0
      %p171 = por %p169, %p170
      %p172 = scmp.ne.s32.totalorder %s164, %s166
      %p173 = scmp.eq.s32.totalorder %s34, 1
      %p174 = por %p172, %p173
      %p175 = scmp.ne.s32.totalorder %s166, %s167
      %p176 = scmp.eq.s32.totalorder %s34, 0
      %p177 = por %p175, %p176
      %p178 = scmp.ne.s32.totalorder %s166, %s167
      %p179 = scmp.eq.s32.totalorder %s35, 1
      %p180 = por %p178, %p179
      %p182 = scmp.ne.s32.totalorder %s167, %s181
      %p183 = scmp.eq.s32.totalorder %s35, 0
      %p184 = por %p182, %p183
      %s186 = sadd.s32 %s185, 1
      %p189 = scmp.eq.s32.totalorder %s29, 1
      %p190 = scmp.ne.s32.totalorder %s185, %s187
      %p191 = scmp.eq.s32.totalorder %s29, 0
      %p192 = por %p190, %p191
      %p193 = scmp.ne.s32.totalorder %s185, %s187
      %p194 = scmp.eq.s32.totalorder %s34, 1
      %p195 = por %p193, %p194
      %p196 = scmp.ne.s32.totalorder %s187, %s188
      %p197 = scmp.eq.s32.totalorder %s34, 0
      %p198 = por %p196, %p197
      %p199 = scmp.ne.s32.totalorder %s187, %s188
      %p200 = scmp.eq.s32.totalorder %s35, 1
      %p201 = por %p199, %p200
      %p203 = scmp.ne.s32.totalorder %s188, %s202
      %p204 = scmp.eq.s32.totalorder %s35, 0
      %p205 = por %p203, %p204
      %s207 = sadd.s32 %s206, 1
      %p210 = scmp.eq.s32.totalorder %s29, 1
      %p211 = scmp.ne.s32.totalorder %s206, %s208
      %p212 = scmp.eq.s32.totalorder %s29, 0
      %p213 = por %p211, %p212
      %p214 = scmp.ne.s32.totalorder %s206, %s208
      %p215 = scmp.eq.s32.totalorder %s34, 1
      %p216 = por %p214, %p215
      %p217 = scmp.ne.s32.totalorder %s208, %s209
      %p218 = scmp.eq.s32.totalorder %s34, 0
      %p219 = por %p217, %p218
      %p220 = scmp.ne.s32.totalorder %s208, %s209
      %p221 = scmp.eq.s32.totalorder %s35, 1
      %p222 = por %p220, %p221
      %p224 = scmp.ne.s32.totalorder %s209, %s223
      %p225 = scmp.eq.s32.totalorder %s35, 0
      %p226 = por %p224, %p225
      %s228 = sadd.s32 %s227, 1
      %p231 = scmp.eq.s32.totalorder %s29, 1
      %p232 = scmp.ne.s32.totalorder %s227, %s229
      %p233 = scmp.eq.s32.totalorder %s29, 0
      %p234 = por %p232, %p233
      %p235 = scmp.ne.s32.totalorder %s227, %s229
      %p236 = scmp.eq.s32.totalorder %s34, 1
      %p237 = por %p235, %p236
      %p238 = scmp.ne.s32.totalorder %s229, %s230
      %p239 = scmp.eq.s32.totalorder %s34, 0
      %p240 = por %p238, %p239
      %p241 = scmp.ne.s32.totalorder %s229, %s230
      %p242 = scmp.eq.s32.totalorder %s35, 1
      %p243 = por %p241, %p242
      %p245 = scmp.ne.s32.totalorder %s230, %s244
      %p246 = scmp.eq.s32.totalorder %s35, 0
      %p247 = por %p245, %p246
      %s249 = sadd.s32 %s248, 1
      %p252 = scmp.eq.s32.totalorder %s29, 1
      %p253 = scmp.ne.s32.totalorder %s248, %s250
      %p254 = scmp.eq.s32.totalorder %s29, 0
      %p255 = por %p253, %p254
      %p256 = scmp.ne.s32.totalorder %s248, %s250
      %p257 = scmp.eq.s32.totalorder %s34, 1
      %p258 = por %p256, %p257
      %p259 = scmp.ne.s32.totalorder %s250, %s251
      %p260 = scmp.eq.s32.totalorder %s34, 0
      %p261 = por %p259, %p260
      %p262 = scmp.ne.s32.totalorder %s250, %s251
      %p263 = scmp.eq.s32.totalorder %s35, 1
      %p264 = por %p262, %p263
      %p266 = scmp.ne.s32.totalorder %s251, %s265
      %p267 = scmp.eq.s32.totalorder %s35, 0
      %p268 = por %p266, %p267
      %s270 = sadd.s32 %s269, 1
      %p273 = scmp.eq.s32.totalorder %s29, 1
      %p274 = scmp.ne.s32.totalorder %s269, %s271
      %p275 = scmp.eq.s32.totalorder %s29, 0
      %p276 = por %p274, %p275
      %p277 = scmp.ne.s32.totalorder %s269, %s271
      %p278 = scmp.eq.s32.totalorder %s34, 1
      %p279 = por %p277, %p278
      %p280 = scmp.ne.s32.totalorder %s271, %s272
      %p281 = scmp.eq.s32.totalorder %s34, 0
      %p282 = por %p280, %p281
      %p283 = scmp.ne.s32.totalorder %s271, %s272
      %p284 = scmp.eq.s32.totalorder %s35, 1
      %p285 = por %p283, %p284
      %p287 = scmp.ne.s32.totalorder %s272, %s286
      %p288 = scmp.eq.s32.totalorder %s35, 0
      %p289 = por %p287, %p288
      %s291 = sadd.s32 %s290, 1
      %p294 = scmp.eq.s32.totalorder %s29, 1
      %p295 = scmp.ne.s32.totalorder %s290, %s292
      %p296 = scmp.eq.s32.totalorder %s29, 0
      %p297 = por %p295, %p296
      %p298 = scmp.ne.s32.totalorder %s290, %s292
      %p299 = scmp.eq.s32.totalorder %s34, 1
      %p300 = por %p298, %p299
      %p301 = scmp.ne.s32.totalorder %s292, %s293
      %p302 = scmp.eq.s32.totalorder %s34, 0
      %p303 = por %p301, %p302
      %p304 = scmp.ne.s32.totalorder %s292, %s293
      %p305 = scmp.eq.s32.totalorder %s35, 1
      %p306 = por %p304, %p305
      %p308 = scmp.ne.s32.totalorder %s293, %s307
      %p309 = scmp.eq.s32.totalorder %s35, 0
      %p310 = por %p308, %p309
      %s312 = sadd.s32 %s311, 1
      %p315 = scmp.eq.s32.totalorder %s29, 1
      %p316 = scmp.ne.s32.totalorder %s311, %s313
      %p317 = scmp.eq.s32.totalorder %s29, 0
      %p318 = por %p316, %p317
      %p319 = scmp.ne.s32.totalorder %s311, %s313
      %p320 = scmp.eq.s32.totalorder %s34, 1
      %p321 = por %p319, %p320
      %p322 = scmp.ne.s32.totalorder %s313, %s314
      %p323 = scmp.eq.s32.totalorder %s34, 0
      %p324 = por %p322, %p323
      %p325 = scmp.ne.s32.totalorder %s313, %s314
      %p326 = scmp.eq.s32.totalorder %s35, 1
      %p327 = por %p325, %p326
      %p329 = scmp.ne.s32.totalorder %s314, %s328
      %p330 = scmp.eq.s32.totalorder %s35, 0
      %p331 = por %p329, %p330
      %s333 = sadd.s32 %s332, 1
      %p336 = scmp.eq.s32.totalorder %s29, 1
      %p337 = scmp.ne.s32.totalorder %s332, %s334
      %p338 = scmp.eq.s32.totalorder %s29, 0
      %p339 = por %p337, %p338
      %p340 = scmp.ne.s32.totalorder %s332, %s334
      %p341 = scmp.eq.s32.totalorder %s34, 1
      %p342 = por %p340, %p341
      %p343 = scmp.ne.s32.totalorder %s334, %s335
      %p344 = scmp.eq.s32.totalorder %s34, 0
      %p345 = por %p343, %p344
      %p346 = scmp.ne.s32.totalorder %s334, %s335
      %p347 = scmp.eq.s32.totalorder %s35, 1
      %p348 = por %p346, %p347
      %p350 = scmp.ne.s32.totalorder %s335, %s349
      %p351 = scmp.eq.s32.totalorder %s35, 0
      %p352 = por %p350, %p351
      %s354 = sadd.s32 %s353, 1
      %p357 = scmp.eq.s32.totalorder %s29, 1
      %p358 = scmp.ne.s32.totalorder %s353, %s355
      %p359 = scmp.eq.s32.totalorder %s29, 0
      %p360 = por %p358, %p359
      %p361 = scmp.ne.s32.totalorder %s353, %s355
      %p362 = scmp.eq.s32.totalorder %s34, 1
      %p363 = por %p361, %p362
      %p364 = scmp.ne.s32.totalorder %s355, %s356
      %p365 = scmp.eq.s32.totalorder %s34, 0
      %p366 = por %p364, %p365
      %p367 = scmp.ne.s32.totalorder %s355, %s356
      %p368 = scmp.eq.s32.totalorder %s35, 1
      %p369 = por %p367, %p368
      %p371 = scmp.ne.s32.totalorder %s356, %s370
      %p372 = scmp.eq.s32.totalorder %s35, 0
      %p373 = por %p371, %p372
      %s375 = sadd.s32 %s374, 1
      %p378 = scmp.eq.s32.totalorder %s29, 1
      %p379 = scmp.ne.s32.totalorder %s374, %s376
      %p380 = scmp.eq.s32.totalorder %s29, 0
      %p381 = por %p379, %p380
      %p382 = scmp.ne.s32.totalorder %s374, %s376
      %p383 = scmp.eq.s32.totalorder %s34, 1
      %p384 = por %p382, %p383
      %p385 = scmp.ne.s32.totalorder %s376, %s377
      %p386 = scmp.eq.s32.totalorder %s34, 0
      %p387 = por %p385, %p386
      %p388 = scmp.ne.s32.totalorder %s376, %s377
      %p389 = scmp.eq.s32.totalorder %s35, 1
      %p390 = por %p388, %p389
      %p392 = scmp.ne.s32.totalorder %s377, %s391
      %p393 = scmp.eq.s32.totalorder %s35, 0
      %p394 = por %p392, %p393
      %s395 = ssub.s32 %s36, %s48
      %s396 = ssub.s32 %s37, %s44
      %s397 = sor.u32 %s395, %s396
      %p398 = scmp.eq.s32.totalorder %s397, 0
      %s400 = sadd.s32 %s399, 1
      %s401 = scalar_select %p398, %s399, %s400
      %p404 = pneg %p398
      %p405 = scmp.eq.s32.totalorder %s29, 1
      %p406 = por %p404, %p405
      %p407 = scmp.ne.s32.totalorder %s399, %s402
      %p408 = scmp.eq.s32.totalorder %s29, 0
      %p409 = por %p407, %p408
      %p410 = scmp.ne.s32.totalorder %s399, %s402
      %p411 = scmp.eq.s32.totalorder %s34, 1
      %p412 = por %p410, %p411
      %p413 = scmp.ne.s32.totalorder %s402, %s403
      %p414 = scmp.eq.s32.totalorder %s34, 0
      %p415 = por %p413, %p414
      %p416 = scmp.ne.s32.totalorder %s402, %s403
      %p417 = scmp.eq.s32.totalorder %s35, 1
      %p418 = por %p416, %p417
      %p420 = scmp.ne.s32.totalorder %s403, %s419
      %p421 = scmp.eq.s32.totalorder %s35, 0
      %p422 = por %p420, %p421
      %p423 = scmp.le.s32.totalorder 1, %s29
      %p424 = scmp.lt.s32.totalorder %s29, 3
      %p425 = pnand %p423, %p424
      %p426 = pneg %p425
      // Predicated region
      $region9: #{tpu_custom_call.1} parent=5 // pred_check
        _
      $region10: #{tpu_custom_call.1} parent=5 // pred_check_branch
        %428 = sbr.rel (%p425) target = $region12
      $region11: #{tpu_custom_call.1} parent=5 // pred_region
        %s429 = ssub.s32 %s29, 1
        // Predicated region
        $region13: #{tpu_custom_call.1} parent=11 // pred_check
          %p430 = pneg %p114
        $region14: #{tpu_custom_call.1} parent=11 // pred_check_branch
          %432 = sbr.rel (%p430) target = $region16
        $region15: #{tpu_custom_call.1} parent=11 // pred_region
          _
        $region16: #{tpu_custom_call.1} parent=11 // pred_fallthru
          _
        // Predicated region
        $region17: #{tpu_custom_call.1} parent=11 // pred_check
          %p433 = pneg %p135
        $region18: #{tpu_custom_call.1} parent=11 // pred_check_branch
          %435 = sbr.rel (%p433) target = $region20
        $region19: #{tpu_custom_call.1} parent=11 // pred_region
          _
        $region20: #{tpu_custom_call.1} parent=11 // pred_fallthru
          _
        // Predicated region
        $region21: #{tpu_custom_call.1} parent=11 // pred_check
          %p436 = pneg %p156
        $region22: #{tpu_custom_call.1} parent=11 // pred_check_branch
          %438 = sbr.rel (%p436) target = $region24
        $region23: #{tpu_custom_call.1} parent=11 // pred_region
          _
        $region24: #{tpu_custom_call.1} parent=11 // pred_fallthru
          _
        // Predicated region
        $region25: #{tpu_custom_call.1} parent=11 // pred_check
          %p439 = pneg %p177
        $region26: #{tpu_custom_call.1} parent=11 // pred_check_branch
          %441 = sbr.rel (%p439) target = $region28
        $region27: #{tpu_custom_call.1} parent=11 // pred_region
          _
        $region28: #{tpu_custom_call.1} parent=11 // pred_fallthru
          _
        // Predicated region
        $region29: #{tpu_custom_call.1} parent=11 // pred_check
          %p442 = pneg %p198
        $region30: #{tpu_custom_call.1} parent=11 // pred_check_branch
          %444 = sbr.rel (%p442) target = $region32
        $region31: #{tpu_custom_call.1} parent=11 // pred_region
          _
        $region32: #{tpu_custom_call.1} parent=11 // pred_fallthru
          _
        // Predicated region
        $region33: #{tpu_custom_call.1} parent=11 // pred_check
          %p445 = pneg %p219
        $region34: #{tpu_custom_call.1} parent=11 // pred_check_branch
          %447 = sbr.rel (%p445) target = $region36
        $region35: #{tpu_custom_call.1} parent=11 // pred_region
          _
        $region36: #{tpu_custom_call.1} parent=11 // pred_fallthru
          _
        // Predicated region
        $region37: #{tpu_custom_call.1} parent=11 // pred_check
          %p448 = pneg %p240
        $region38: #{tpu_custom_call.1} parent=11 // pred_check_branch
          %450 = sbr.rel (%p448) target = $region40
        $region39: #{tpu_custom_call.1} parent=11 // pred_region
          _
        $region40: #{tpu_custom_call.1} parent=11 // pred_fallthru
          _
        // Predicated region
        $region41: #{tpu_custom_call.1} parent=11 // pred_check
          %p451 = pneg %p261
        $region42: #{tpu_custom_call.1} parent=11 // pred_check_branch
          %453 = sbr.rel (%p451) target = $region44
        $region43: #{tpu_custom_call.1} parent=11 // pred_region
          _
        $region44: #{tpu_custom_call.1} parent=11 // pred_fallthru
          _
        // Predicated region
        $region45: #{tpu_custom_call.1} parent=11 // pred_check
          %p454 = pneg %p282
        $region46: #{tpu_custom_call.1} parent=11 // pred_check_branch
          %456 = sbr.rel (%p454) target = $region48
        $region47: #{tpu_custom_call.1} parent=11 // pred_region
          %s458 = ssub.s32 512, 512
          %459 = vsyncadd [#allocation7], %s458
          %s460 = sshll.u32 [#allocation6], 4
          %s461 = int_to_ptr.vmem [resolvable:$true] %s460
          %466 = dma.hbm_to_vmem [thread:$0]  %s10, 512, %s461, [#allocation7], 128, 128, 8
        $region48: #{tpu_custom_call.1} parent=11 // pred_fallthru
          _
        // Predicated region
        $region49: #{tpu_custom_call.1} parent=11 // pred_check
          %p467 = pneg %p303
        $region50: #{tpu_custom_call.1} parent=11 // pred_check_branch
          %469 = sbr.rel (%p467) target = $region52
        $region51: #{tpu_custom_call.1} parent=11 // pred_region
          _
        $region52: #{tpu_custom_call.1} parent=11 // pred_fallthru
          _
        // Predicated region
        $region53: #{tpu_custom_call.1} parent=11 // pred_check
          %p470 = pneg %p324
        $region54: #{tpu_custom_call.1} parent=11 // pred_check_branch
          %472 = sbr.rel (%p470) target = $region56
        $region55: #{tpu_custom_call.1} parent=11 // pred_region
          _
        $region56: #{tpu_custom_call.1} parent=11 // pred_fallthru
          _
        // Predicated region
        $region57: #{tpu_custom_call.1} parent=11 // pred_check
          %p473 = pneg %p345
        $region58: #{tpu_custom_call.1} parent=11 // pred_check_branch
          %475 = sbr.rel (%p473) target = $region60
        $region59: #{tpu_custom_call.1} parent=11 // pred_region
          _
        $region60: #{tpu_custom_call.1} parent=11 // pred_fallthru
          _
        // Predicated region
        $region61: #{tpu_custom_call.1} parent=11 // pred_check
          %p476 = pneg %p366
        $region62: #{tpu_custom_call.1} parent=11 // pred_check_branch
          %478 = sbr.rel (%p476) target = $region64
        $region63: #{tpu_custom_call.1} parent=11 // pred_region
          _
        $region64: #{tpu_custom_call.1} parent=11 // pred_fallthru
          _
        // Predicated region
        $region65: #{tpu_custom_call.1} parent=11 // pred_check
          %p479 = pneg %p387
        $region66: #{tpu_custom_call.1} parent=11 // pred_check_branch
          %481 = sbr.rel (%p479) target = $region68
        $region67: #{tpu_custom_call.1} parent=11 // pred_region
          _
        $region68: #{tpu_custom_call.1} parent=11 // pred_fallthru
          _
      $region12: #{tpu_custom_call.1} parent=5 // pred_fallthru
        _
      %p482 = scmp.lt.s32.totalorder %s29, 2
      // Predicated region
      $region69: #{tpu_custom_call.1} parent=5 // pred_check
        %p483 = pneg %p482
      $region70: #{tpu_custom_call.1} parent=5 // pred_check_branch
        %485 = sbr.rel (%p483) target = $region72
      $region71: #{tpu_custom_call.1} parent=5 // pred_region
        // Predicated region
        $region73: #{tpu_custom_call.1} parent=71 // pred_check
          %p486 = pneg %p61
        $region74: #{tpu_custom_call.1} parent=71 // pred_check_branch
          %488 = sbr.rel (%p486) target = $region76
        $region75: #{tpu_custom_call.1} parent=71 // pred_region
          %s489 = sand.u32 %s51, 1
          %s490 = scalar_lea.sflag [#allocation4], %s489
          %s491 = sand.u32 %s51, 1
          %s492 = smul.addr %s491, 8
          %s493 = scalar_lea.vmem [#allocation3], %s492
          %s495 = ssub.s32 128, 128
          %496 = vsyncadd %s490, %s495
          %s497 = smul.addr %s36, 128
          %s498 = scalar_lea.hbm %s0, %s497
          %s500 = sshll.u32 %s493, 4
          %s501 = int_to_ptr.vmem [resolvable:$true] %s500
          %503 = dma.hbm_to_vmem [thread:$0]  %s498, 128, %s501, %s490
        $region76: #{tpu_custom_call.1} parent=71 // pred_fallthru
          _
        // Predicated region
        $region77: #{tpu_custom_call.1} parent=71 // pred_check
          %p504 = pneg %p87
        $region78: #{tpu_custom_call.1} parent=71 // pred_check_branch
          %506 = sbr.rel (%p504) target = $region80
        $region79: #{tpu_custom_call.1} parent=71 // pred_region
          %p507 = scmp.lt.s32.totalorder %s36, 1
          %s508 = scalar_select %p507, %s36, 1
          %s509 = scalar_lea.vmem %s1, %s508
        $region80: #{tpu_custom_call.1} parent=71 // pred_fallthru
          _
      $region72: #{tpu_custom_call.1} parent=5 // pred_fallthru
        _
      %p510 = scmp.le.s32.totalorder 1, %s29
      %p511 = scmp.lt.s32.totalorder %s29, 3
      %p512 = pnand %p510, %p511
      %p513 = pneg %p512
      // Predicated region
      $region81: #{tpu_custom_call.1} parent=5 // pred_check
        _
      $region82: #{tpu_custom_call.1} parent=5 // pred_check_branch
        %515 = sbr.rel (%p512) target = $region84
      $region83: #{tpu_custom_call.1} parent=5 // pred_region
        %s516 = ssub.s32 %s29, 1
        %s517 = sand.u32 %s54, 1
        %s518 = scalar_lea.sflag [#allocation4], %s517
        %s519 = sand.u32 %s54, 1
        %s520 = smul.addr %s519, 8
        %s521 = scalar_lea.vmem [#allocation3], %s520
        // Predicated region
        $region85: #{tpu_custom_call.1} parent=83 // pred_check
          %p522 = pneg %p67
        $region86: #{tpu_custom_call.1} parent=83 // pred_check_branch
          %524 = sbr.rel (%p522) target = $region88
        $region87: #{tpu_custom_call.1} parent=83 // pred_region
          %525 = dma.done %s518, 128
        $region88: #{tpu_custom_call.1} parent=83 // pred_fallthru
          _
        // Predicated region
        $region89: #{tpu_custom_call.1} parent=83 // pred_check
          %p526 = pneg %p282
        $region90: #{tpu_custom_call.1} parent=83 // pred_check_branch
          %528 = sbr.rel (%p526) target = $region92
        $region91: #{tpu_custom_call.1} parent=83 // pred_region
          %529 = dma.done [#allocation7], 512
        $region92: #{tpu_custom_call.1} parent=83 // pred_fallthru
          _
        %s530 = sand.u32 %s54, 1
        %s531 = scalar_lea.sflag [#allocation4], %s530
        %s532 = sand.u32 %s54, 1
        %s533 = smul.addr %s532, 8
        %s534 = scalar_lea.vmem [#allocation3], %s533
        %p535 = pneg %p67
        %p536 = pneg %p64
        %p537 = scmp.lt.s32.totalorder %s38, 1
        %s538 = scalar_select %p537, %s38, 1
        %s539 = scalar_lea.vmem %s1, %s538
        %p540 = pneg %p93
        %p541 = pneg %p90
        %p542 = pneg %p114
        %p543 = pneg %p111
        %p544 = pneg %p135
        %p545 = pneg %p132
        %p546 = pneg %p156
        %p547 = pneg %p153
        %p548 = pneg %p177
        %p549 = pneg %p174
        %p550 = pneg %p198
        %p551 = pneg %p195
        %p552 = pneg %p219
        %p553 = pneg %p216
        %p554 = pneg %p240
        %p555 = pneg %p237
        %p556 = pneg %p261
        %p557 = pneg %p258
        %p558 = pneg %p282
        %p559 = pneg %p279
        %p560 = pneg %p303
        %p561 = pneg %p300
        %p562 = pneg %p324
        %p563 = pneg %p321
        %p564 = pneg %p345
        %p565 = pneg %p342
        %p566 = pneg %p366
        %p567 = pneg %p363
        %p568 = pneg %p387
        %p569 = pneg %p384
        %p570 = pneg %p415
        %p571 = pneg %p412
        %s572 = sand.u32 %s402, 1
        %s573 = scalar_lea.sflag [#allocation5], %s572
        %s574 = sand.u32 %s402, 1
        %s575 = smul.addr %s574, 8
        %s576 = scalar_lea.vmem [#allocation8], %s575
        %p577 = scmp.lt.s32.totalorder %s38, 1
        %s578 = scalar_select %p577, %s38, 1
        %s579 = scalar_lea.vmem %s1, %s578
        %p580 = scmp.eq.s32.totalorder %s39, 0
        // Predicated region
        $region93: #{tpu_custom_call.1} parent=83 // pred_check
          %p581 = pneg %p580
        $region94: #{tpu_custom_call.1} parent=83 // pred_check_branch
          %583 = sbr.rel (%p581) target = $region96
        $region95: #{tpu_custom_call.1} parent=83 // pred_region
          %v584 = vld [vmem:[%s521] sm:$0xff]
          %v585 = vld [vmem:[%s4] sm:$0xff]
          %v586 = vld [vmem:[%s4 + $0x8] sm:$0xff]
          %v587 = vld [vmem:[%s4 + $0x10] sm:$0xff]
          %v588 = vld [vmem:[%s4 + $0x18] sm:$0xff]
          %v589 = vld [vmem:[%s5] sm:$0x1]
          %v591 = vlaneseq
          %v592 = vshrl.u32 %v591, 7
          %v593 = vsub.s32 0, %v592
          %v594 = vrot.slane %v589, %v593
          %vm596 = vcmask 261120
          %v598 = vsel %vm596, %v584, 0
          %600 = vmatprep.subr.mxu0 0.0
          %601 = vmatpush1.msra.mxu0 %v585
          %602 = vmatprep.subr.mxu0 0.0
          %603 = vmatpush1.msra.mxu0 %v586
          %604 = vmatprep.subr.mxu0 0.0
          %605 = vmatpush1.msra.mxu0 %v587
          %606 = vmatprep.subr.mxu0 0.0
          %607 = vmatpush1.msra.mxu0 %v588
          %608 = vmatprep.subr.mxu0 0.0
          %609 = vmatpush1.msra.mxu0 0.0
          %610 = vmatprep.subr.mxu0 0.0
          %611 = vmatpush1.msra.mxu0 0.0
          %612 = vmatprep.subr.mxu0 0.0
          %613 = vmatpush1.msra.mxu0 0.0
          %614 = vmatprep.subr.mxu0 0.0
          %615 = vmatpush1.msra.mxu0 0.0
          %616 = vmatprep.subr.mxu0 0.0
          %617 = vmatpush1.msra.mxu0 0.0
          %618 = vmatprep.subr.mxu0 0.0
          %619 = vmatpush1.msra.mxu0 0.0
          %620 = vmatprep.subr.mxu0 0.0
          %621 = vmatpush1.msra.mxu0 0.0
          %622 = vmatprep.subr.mxu0 0.0
          %623 = vmatpush1.msra.mxu0 0.0
          %624 = vmatprep.subr.mxu0 0.0
          %625 = vmatpush1.msra.mxu0 0.0
          %626 = vmatprep.subr.mxu0 0.0
          %627 = vmatpush1.msra.mxu0 0.0
          %628 = vmatprep.subr.mxu0 0.0
          %629 = vmatpush1.msra.mxu0 0.0
          %630 = vmatprep.subr.mxu0 0.0
          %631 = vmatpush1.msra.mxu0 0.0
          %632 = vmatprep.subr.mxu0 0.0
          %633 = vmatpush1.msra.mxu0 0.0
          %634 = vmatprep.subr.mxu0 0.0
          %635 = vmatpush1.msra.mxu0 0.0
          %636 = vmatprep.subr.mxu0 0.0
          %637 = vmatpush1.msra.mxu0 0.0
          %638 = vmatprep.subr.mxu0 0.0
          %639 = vmatpush1.msra.mxu0 0.0
          %640 = vmatprep.subr.mxu0 0.0
          %641 = vmatpush1.msra.mxu0 0.0
          %642 = vmatprep.subr.mxu0 0.0
          %643 = vmatpush1.msra.mxu0 0.0
          %644 = vmatprep.subr.mxu0 0.0
          %645 = vmatpush1.msra.mxu0 0.0
          %646 = vmatprep.subr.mxu0 0.0
          %647 = vmatpush1.msra.mxu0 0.0
          %648 = vmatprep.subr.mxu0 0.0
          %649 = vmatpush1.msra.mxu0 0.0
          %650 = vmatprep.subr.mxu0 0.0
          %651 = vmatpush1.msra.mxu0 0.0
          %652 = vmatprep.subr.mxu0 0.0
          %653 = vmatpush1.msra.mxu0 0.0
          %654 = vmatprep.subr.mxu0 0.0
          %655 = vmatpush1.msra.mxu0 0.0
          %656 = vmatprep.subr.mxu0 0.0
          %657 = vmatpush1.msra.mxu0 0.0
          %658 = vmatprep.subr.mxu0 0.0
          %659 = vmatpush1.msra.mxu0 0.0
          %660 = vmatprep.subr.mxu0 0.0
          %661 = vmatpush1.msra.mxu0 0.0
          %662 = vmatprep.subr.mxu0 0.0
          %663 = vmatpush1.msra.mxu0 0.0
          %664 = vmatprep.mubr.f32.mxu0 0.0
          %665 = vmatmul.mubr.f32.gmra.mrb[0].mxu0 %v598
          %v666 = vpop.f32.mrb[0].mxu0
          %v667 = vadd.f32 %v594, %v666
          %v668 = vpop.f32.mrb[0].mxu0
          %669 = vdwg.mxu0
          %vm670 = vcmask 523264
          %671 = vst.msk [vmem:[#allocation2] sm:$0xff] %vm670, %v667
        $region96: #{tpu_custom_call.1} parent=83 // pred_fallthru
          _
        %s672 = smul.u32 %s39, 8
        %s673 = scalar_lea.vmem %s521, %s672 [#allocation3]
        %v674 = vld [vmem:[%s673] sm:$0xff]
        %v675 = vld [vmem:[%s2] sm:$0xff]
        %v676 = vld [vmem:[%s2 + $0x8] sm:$0xff]
        %v677 = vld [vmem:[%s2 + $0x10] sm:$0xff]
        %v678 = vld [vmem:[%s2 + $0x18] sm:$0xff]
        %v679 = vld [vmem:[%s3] sm:$0x1]
        %v681 = vlaneseq
        %v682 = vshrl.u32 %v681, 7
        %v683 = vsub.s32 0, %v682
        %v684 = vrot.slane %v679, %v683
        %vm686 = vcmask 261120
        %v688 = vsel %vm686, %v674, 0
        %690 = vmatprep.subr.mxu0 0.0
        %691 = vmatpush1.msra.mxu0 %v675
        %692 = vmatprep.subr.mxu0 0.0
        %693 = vmatpush1.msra.mxu0 %v676
        %694 = vmatprep.subr.mxu0 0.0
        %695 = vmatpush1.msra.mxu0 %v677
        %696 = vmatprep.subr.mxu0 0.0
        %697 = vmatpush1.msra.mxu0 %v678
        %698 = vmatprep.subr.mxu0 0.0
        %699 = vmatpush1.msra.mxu0 0.0
        %700 = vmatprep.subr.mxu0 0.0
        %701 = vmatpush1.msra.mxu0 0.0
        %702 = vmatprep.subr.mxu0 0.0
        %703 = vmatpush1.msra.mxu0 0.0
        %704 = vmatprep.subr.mxu0 0.0
        %705 = vmatpush1.msra.mxu0 0.0
        %706 = vmatprep.subr.mxu0 0.0
        %707 = vmatpush1.msra.mxu0 0.0
        %708 = vmatprep.subr.mxu0 0.0
        %709 = vmatpush1.msra.mxu0 0.0
        %710 = vmatprep.subr.mxu0 0.0
        %711 = vmatpush1.msra.mxu0 0.0
        %712 = vmatprep.subr.mxu0 0.0
        %713 = vmatpush1.msra.mxu0 0.0
        %714 = vmatprep.subr.mxu0 0.0
        %715 = vmatpush1.msra.mxu0 0.0
        %716 = vmatprep.subr.mxu0 0.0
        %717 = vmatpush1.msra.mxu0 0.0
        %718 = vmatprep.subr.mxu0 0.0
        %719 = vmatpush1.msra.mxu0 0.0
        %720 = vmatprep.subr.mxu0 0.0
        %721 = vmatpush1.msra.mxu0 0.0
        %722 = vmatprep.subr.mxu0 0.0
        %723 = vmatpush1.msra.mxu0 0.0
        %724 = vmatprep.subr.mxu0 0.0
        %725 = vmatpush1.msra.mxu0 0.0
        %726 = vmatprep.subr.mxu0 0.0
        %727 = vmatpush1.msra.mxu0 0.0
        %728 = vmatprep.subr.mxu0 0.0
        %729 = vmatpush1.msra.mxu0 0.0
        %730 = vmatprep.subr.mxu0 0.0
        %731 = vmatpush1.msra.mxu0 0.0
        %732 = vmatprep.subr.mxu0 0.0
        %733 = vmatpush1.msra.mxu0 0.0
        %734 = vmatprep.subr.mxu0 0.0
        %735 = vmatpush1.msra.mxu0 0.0
        %736 = vmatprep.subr.mxu0 0.0
        %737 = vmatpush1.msra.mxu0 0.0
        %738 = vmatprep.subr.mxu0 0.0
        %739 = vmatpush1.msra.mxu0 0.0
        %740 = vmatprep.subr.mxu0 0.0
        %741 = vmatpush1.msra.mxu0 0.0
        %742 = vmatprep.subr.mxu0 0.0
        %743 = vmatpush1.msra.mxu0 0.0
        %744 = vmatprep.subr.mxu0 0.0
        %745 = vmatpush1.msra.mxu0 0.0
        %746 = vmatprep.subr.mxu0 0.0
        %747 = vmatpush1.msra.mxu0 0.0
        %748 = vmatprep.subr.mxu0 0.0
        %749 = vmatpush1.msra.mxu0 0.0
        %750 = vmatprep.subr.mxu0 0.0
        %751 = vmatpush1.msra.mxu0 0.0
        %752 = vmatprep.subr.mxu0 0.0
        %753 = vmatpush1.msra.mxu0 0.0
        %754 = vmatprep.mubr.f32.mxu0 0.0
        %755 = vmatmul.mubr.f32.gmra.mrb[0].mxu0 %v688
        %v756 = vpop.f32.mrb[0].mxu0
        %v757 = vadd.f32 %v684, %v756
        %v758 = vpop.f32.mrb[0].mxu0
        %759 = vdwg.mxu0
        %v760 = vld [vmem:[%s579] sm:$0x1]
        %v761 = vld [vmem:[#allocation2] sm:$0xff]
        %vm762 = vcmask 64512
        %v764 = vsel %vm762, %v757, 0
        %v767 = vsel %vm762, %v761, 0
        %769 = vmatprep.subr.mxu0 0.0
        %770 = vmatpush1.xpose.msra.mxu0 %v767
        %771 = vmatprep.subr.mxu0 0.0
        %772 = vmatpush1.xpose.msra.mxu0 0.0
        %773 = vmatprep.subr.mxu0 0.0
        %774 = vmatpush1.xpose.msra.mxu0 0.0
        %775 = vmatprep.subr.mxu0 0.0
        %776 = vmatpush1.xpose.msra.mxu0 0.0
        %777 = vmatprep.subr.mxu0 0.0
        %778 = vmatpush1.xpose.msra.mxu0 0.0
        %779 = vmatprep.subr.mxu0 0.0
        %780 = vmatpush1.xpose.msra.mxu0 0.0
        %781 = vmatprep.subr.mxu0 0.0
        %782 = vmatpush1.xpose.msra.mxu0 0.0
        %783 = vmatprep.subr.mxu0 0.0
        %784 = vmatpush1.xpose.msra.mxu0 0.0
        %785 = vmatprep.subr.mxu0 0.0
        %786 = vmatpush1.xpose.msra.mxu0 0.0
        %787 = vmatprep.subr.mxu0 0.0
        %788 = vmatpush1.xpose.msra.mxu0 0.0
        %789 = vmatprep.subr.mxu0 0.0
        %790 = vmatpush1.xpose.msra.mxu0 0.0
        %791 = vmatprep.subr.mxu0 0.0
        %792 = vmatpush1.xpose.msra.mxu0 0.0
        %793 = vmatprep.subr.mxu0 0.0
        %794 = vmatpush1.xpose.msra.mxu0 0.0
        %795 = vmatprep.subr.mxu0 0.0
        %796 = vmatpush1.xpose.msra.mxu0 0.0
        %797 = vmatprep.subr.mxu0 0.0
        %798 = vmatpush1.xpose.msra.mxu0 0.0
        %799 = vmatprep.subr.mxu0 0.0
        %800 = vmatpush1.xpose.msra.mxu0 0.0
        %801 = vmatprep.subr.mxu0 0.0
        %802 = vmatpush1.xpose.msra.mxu0 0.0
        %803 = vmatprep.subr.mxu0 0.0
        %804 = vmatpush1.xpose.msra.mxu0 0.0
        %805 = vmatprep.subr.mxu0 0.0
        %806 = vmatpush1.xpose.msra.mxu0 0.0
        %807 = vmatprep.subr.mxu0 0.0
        %808 = vmatpush1.xpose.msra.mxu0 0.0
        %809 = vmatprep.subr.mxu0 0.0
        %810 = vmatpush1.xpose.msra.mxu0 0.0
        %811 = vmatprep.subr.mxu0 0.0
        %812 = vmatpush1.xpose.msra.mxu0 0.0
        %813 = vmatprep.subr.mxu0 0.0
        %814 = vmatpush1.xpose.msra.mxu0 0.0
        %815 = vmatprep.subr.mxu0 0.0
        %816 = vmatpush1.xpose.msra.mxu0 0.0
        %817 = vmatprep.subr.mxu0 0.0
        %818 = vmatpush1.xpose.msra.mxu0 0.0
        %819 = vmatprep.subr.mxu0 0.0
        %820 = vmatpush1.xpose.msra.mxu0 0.0
        %821 = vmatprep.subr.mxu0 0.0
        %822 = vmatpush1.xpose.msra.mxu0 0.0
        %823 = vmatprep.subr.mxu0 0.0
        %824 = vmatpush1.xpose.msra.mxu0 0.0
        %825 = vmatprep.subr.mxu0 0.0
        %826 = vmatpush1.xpose.msra.mxu0 0.0
        %827 = vmatprep.subr.mxu0 0.0
        %828 = vmatpush1.xpose.msra.mxu0 0.0
        %829 = vmatprep.subr.mxu0 0.0
        %830 = vmatpush1.xpose.msra.mxu0 0.0
        %831 = vmatprep.subr.mxu0 0.0
        %832 = vmatpush1.xpose.msra.mxu0 0.0
        %833 = vmatprep.mubr.f32.mxu0 0.0
        %834 = vmatmul.mubr.f32.gmra.mrb[0].mxu0 %v764
        %v835 = vpop.f32.mrb[0].mxu0
        %v836 = vadd.f32 0.0, %v835
        %v837 = vpop.f32.mrb[0].mxu0
        %838 = vdwg.mxu0
        %vm839 = vcmp.eq.s32.totalorder %v760, 0
        %v840 = vsel %vm839, 1, 0
        %v841 = vlaneseq
        %v842 = vshrl.u32 %v841, 7
        %v843 = vsub.s32 0, %v842
        %v844 = vrot.slane %v840, %v843
        %vm845 = vcmp.eq.s32.totalorder %v844, 1
        %v846 = vsel %vm845, -1e+10, %v836
        %v847 = vsel %vm762, %v846, -inf
        %848 = vmax.xlane.f32.xlu0 %v847
        %v849 = vpop.xlane.xlu0 %848
        %v850 = vsub.f32 %v846, %v849
        %v851 = vmul.f32 %v850, 1.442695
        %v852 = vpow.pop %v851
        %v853 = vsel %vm762, %v852, 0.0
        %854 = vadd.xlane.f32.xlu0 %v853
        %v855 = vpop.xlane.xlu0 %854
        %v856 = vrcp.pop %v855
        %v857 = vmul.f32 %v852, %v856
        %858 = vrot.lane.b32.xlu0 %v761, 96
        %v859 = vpop.permute.xlu0 %858
        %v862 = vsel %vm762, %v857, 0
        %864 = vmatprep.subr.mxu0 0.0
        %865 = vmatpush1.msra.mxu0 %v859
        %866 = vmatprep.subr.mxu0 0.0
        %867 = vmatpush1.msra.mxu0 0.0
        %868 = vmatprep.subr.mxu0 0.0
        %869 = vmatpush1.msra.mxu0 0.0
        %870 = vmatprep.subr.mxu0 0.0
        %871 = vmatpush1.msra.mxu0 0.0
        %872 = vmatprep.subr.mxu0 0.0
        %873 = vmatpush1.msra.mxu0 0.0
        %874 = vmatprep.subr.mxu0 0.0
        %875 = vmatpush1.msra.mxu0 0.0
        %876 = vmatprep.subr.mxu0 0.0
        %877 = vmatpush1.msra.mxu0 0.0
        %878 = vmatprep.subr.mxu0 0.0
        %879 = vmatpush1.msra.mxu0 0.0
        %880 = vmatprep.subr.mxu0 0.0
        %881 = vmatpush1.msra.mxu0 0.0
        %882 = vmatprep.subr.mxu0 0.0
        %883 = vmatpush1.msra.mxu0 0.0
        %884 = vmatprep.subr.mxu0 0.0
        %885 = vmatpush1.msra.mxu0 0.0
        %886 = vmatprep.subr.mxu0 0.0
        %887 = vmatpush1.msra.mxu0 0.0
        %888 = vmatprep.subr.mxu0 0.0
        %889 = vmatpush1.msra.mxu0 0.0
        %890 = vmatprep.subr.mxu0 0.0
        %891 = vmatpush1.msra.mxu0 0.0
        %892 = vmatprep.subr.mxu0 0.0
        %893 = vmatpush1.msra.mxu0 0.0
        %894 = vmatprep.subr.mxu0 0.0
        %895 = vmatpush1.msra.mxu0 0.0
        %896 = vmatprep.subr.mxu0 0.0
        %897 = vmatpush1.msra.mxu0 0.0
        %898 = vmatprep.subr.mxu0 0.0
        %899 = vmatpush1.msra.mxu0 0.0
        %900 = vmatprep.subr.mxu0 0.0
        %901 = vmatpush1.msra.mxu0 0.0
        %902 = vmatprep.subr.mxu0 0.0
        %903 = vmatpush1.msra.mxu0 0.0
        %904 = vmatprep.subr.mxu0 0.0
        %905 = vmatpush1.msra.mxu0 0.0
        %906 = vmatprep.subr.mxu0 0.0
        %907 = vmatpush1.msra.mxu0 0.0
        %908 = vmatprep.subr.mxu0 0.0
        %909 = vmatpush1.msra.mxu0 0.0
        %910 = vmatprep.subr.mxu0 0.0
        %911 = vmatpush1.msra.mxu0 0.0
        %912 = vmatprep.subr.mxu0 0.0
        %913 = vmatpush1.msra.mxu0 0.0
        %914 = vmatprep.subr.mxu0 0.0
        %915 = vmatpush1.msra.mxu0 0.0
        %916 = vmatprep.subr.mxu0 0.0
        %917 = vmatpush1.msra.mxu0 0.0
        %918 = vmatprep.subr.mxu0 0.0
        %919 = vmatpush1.msra.mxu0 0.0
        %920 = vmatprep.subr.mxu0 0.0
        %921 = vmatpush1.msra.mxu0 0.0
        %922 = vmatprep.subr.mxu0 0.0
        %923 = vmatpush1.msra.mxu0 0.0
        %924 = vmatprep.subr.mxu0 0.0
        %925 = vmatpush1.msra.mxu0 0.0
        %926 = vmatprep.subr.mxu0 0.0
        %927 = vmatpush1.msra.mxu0 0.0
        %928 = vmatprep.mubr.f32.mxu0 0.0
        %929 = vmatmul.mubr.f32.gmra.mrb[0].mxu0 %v862
        %v930 = vpop.f32.mrb[0].mxu0
        %v931 = vadd.f32 0.0, %v930
        %v932 = vpop.f32.mrb[0].mxu0
        %933 = vdwg.mxu0
        %v934 = vld [vmem:[#allocation2] sm:$0xff]
        %935 = vrot.lane.b32.xlu0 %v757, 120
        %v936 = vpop.permute.xlu0 %935
        %938 = vrot.lane.b32.xlu0 %v934, 120
        %v939 = vpop.permute.xlu0 %938
        %v940 = vsel %vm762, %v936, 0
        %v942 = vsel %vm762, %v939, 0
        %944 = vmatprep.subr.mxu0 0.0
        %945 = vmatpush1.xpose.msra.mxu0 %v942
        %946 = vmatprep.subr.mxu0 0.0
        %947 = vmatpush1.xpose.msra.mxu0 0.0
        %948 = vmatprep.subr.mxu0 0.0
        %949 = vmatpush1.xpose.msra.mxu0 0.0
        %950 = vmatprep.subr.mxu0 0.0
        %951 = vmatpush1.xpose.msra.mxu0 0.0
        %952 = vmatprep.subr.mxu0 0.0
        %953 = vmatpush1.xpose.msra.mxu0 0.0
        %954 = vmatprep.subr.mxu0 0.0
        %955 = vmatpush1.xpose.msra.mxu0 0.0
        %956 = vmatprep.subr.mxu0 0.0
        %957 = vmatpush1.xpose.msra.mxu0 0.0
        %958 = vmatprep.subr.mxu0 0.0
        %959 = vmatpush1.xpose.msra.mxu0 0.0
        %960 = vmatprep.subr.mxu0 0.0
        %961 = vmatpush1.xpose.msra.mxu0 0.0
        %962 = vmatprep.subr.mxu0 0.0
        %963 = vmatpush1.xpose.msra.mxu0 0.0
        %964 = vmatprep.subr.mxu0 0.0
        %965 = vmatpush1.xpose.msra.mxu0 0.0
        %966 = vmatprep.subr.mxu0 0.0
        %967 = vmatpush1.xpose.msra.mxu0 0.0
        %968 = vmatprep.subr.mxu0 0.0
        %969 = vmatpush1.xpose.msra.mxu0 0.0
        %970 = vmatprep.subr.mxu0 0.0
        %971 = vmatpush1.xpose.msra.mxu0 0.0
        %972 = vmatprep.subr.mxu0 0.0
        %973 = vmatpush1.xpose.msra.mxu0 0.0
        %974 = vmatprep.subr.mxu0 0.0
        %975 = vmatpush1.xpose.msra.mxu0 0.0
        %976 = vmatprep.subr.mxu0 0.0
        %977 = vmatpush1.xpose.msra.mxu0 0.0
        %978 = vmatprep.subr.mxu0 0.0
        %979 = vmatpush1.xpose.msra.mxu0 0.0
        %980 = vmatprep.subr.mxu0 0.0
        %981 = vmatpush1.xpose.msra.mxu0 0.0
        %982 = vmatprep.subr.mxu0 0.0
        %983 = vmatpush1.xpose.msra.mxu0 0.0
        %984 = vmatprep.subr.mxu0 0.0
        %985 = vmatpush1.xpose.msra.mxu0 0.0
        %986 = vmatprep.subr.mxu0 0.0
        %987 = vmatpush1.xpose.msra.mxu0 0.0
        %988 = vmatprep.subr.mxu0 0.0
        %989 = vmatpush1.xpose.msra.mxu0 0.0
        %990 = vmatprep.subr.mxu0 0.0
        %991 = vmatpush1.xpose.msra.mxu0 0.0
        %992 = vmatprep.subr.mxu0 0.0
        %993 = vmatpush1.xpose.msra.mxu0 0.0
        %994 = vmatprep.subr.mxu0 0.0
        %995 = vmatpush1.xpose.msra.mxu0 0.0
        %996 = vmatprep.subr.mxu0 0.0
        %997 = vmatpush1.xpose.msra.mxu0 0.0
        %998 = vmatprep.subr.mxu0 0.0
        %999 = vmatpush1.xpose.msra.mxu0 0.0
        %1000 = vmatprep.subr.mxu0 0.0
        %1001 = vmatpush1.xpose.msra.mxu0 0.0
        %1002 = vmatprep.subr.mxu0 0.0
        %1003 = vmatpush1.xpose.msra.mxu0 0.0
        %1004 = vmatprep.subr.mxu0 0.0
        %1005 = vmatpush1.xpose.msra.mxu0 0.0
        %1006 = vmatprep.subr.mxu0 0.0
        %1007 = vmatpush1.xpose.msra.mxu0 0.0
        %1008 = vmatprep.mubr.f32.mxu0 0.0
        %1009 = vmatmul.mubr.f32.gmra.mrb[0].mxu0 %v940
        %v1010 = vpop.f32.mrb[0].mxu0
        %v1011 = vadd.f32 0.0, %v1010
        %v1012 = vpop.f32.mrb[0].mxu0
        %1013 = vdwg.mxu0
        %v1014 = vsel %vm845, -1e+10, %v1011
        %v1015 = vsel %vm762, %v1014, -inf
        %1016 = vmax.xlane.f32.xlu0 %v1015
        %v1017 = vpop.xlane.xlu0 %1016
        %v1018 = vsub.f32 %v1014, %v1017
        %v1019 = vmul.f32 %v1018, 1.442695
        %v1020 = vpow.pop %v1019
        %v1021 = vsel %vm762, %v1020, 0.0
        %1022 = vadd.xlane.f32.xlu0 %v1021
        %v1023 = vpop.xlane.xlu0 %1022
        %v1024 = vrcp.pop %v1023
        %v1025 = vmul.f32 %v1020, %v1024
        %1026 = vrot.lane.b32.xlu0 %v934, 88
        %v1027 = vpop.permute.xlu0 %1026
        %v1030 = vsel %vm762, %v1025, 0
        %1032 = vmatprep.subr.mxu0 0.0
        %1033 = vmatpush1.msra.mxu0 %v1027
        %1034 = vmatprep.subr.mxu0 0.0
        %1035 = vmatpush1.msra.mxu0 0.0
        %1036 = vmatprep.subr.mxu0 0.0
        %1037 = vmatpush1.msra.mxu0 0.0
        %1038 = vmatprep.subr.mxu0 0.0
        %1039 = vmatpush1.msra.mxu0 0.0
        %1040 = vmatprep.subr.mxu0 0.0
        %1041 = vmatpush1.msra.mxu0 0.0
        %1042 = vmatprep.subr.mxu0 0.0
        %1043 = vmatpush1.msra.mxu0 0.0
        %1044 = vmatprep.subr.mxu0 0.0
        %1045 = vmatpush1.msra.mxu0 0.0
        %1046 = vmatprep.subr.mxu0 0.0
        %1047 = vmatpush1.msra.mxu0 0.0
        %1048 = vmatprep.subr.mxu0 0.0
        %1049 = vmatpush1.msra.mxu0 0.0
        %1050 = vmatprep.subr.mxu0 0.0
        %1051 = vmatpush1.msra.mxu0 0.0
        %1052 = vmatprep.subr.mxu0 0.0
        %1053 = vmatpush1.msra.mxu0 0.0
        %1054 = vmatprep.subr.mxu0 0.0
        %1055 = vmatpush1.msra.mxu0 0.0
        %1056 = vmatprep.subr.mxu0 0.0
        %1057 = vmatpush1.msra.mxu0 0.0
        %1058 = vmatprep.subr.mxu0 0.0
        %1059 = vmatpush1.msra.mxu0 0.0
        %1060 = vmatprep.subr.mxu0 0.0
        %1061 = vmatpush1.msra.mxu0 0.0
        %1062 = vmatprep.subr.mxu0 0.0
        %1063 = vmatpush1.msra.mxu0 0.0
        %1064 = vmatprep.subr.mxu0 0.0
        %1065 = vmatpush1.msra.mxu0 0.0
        %1066 = vmatprep.subr.mxu0 0.0
        %1067 = vmatpush1.msra.mxu0 0.0
        %1068 = vmatprep.subr.mxu0 0.0
        %1069 = vmatpush1.msra.mxu0 0.0
        %1070 = vmatprep.subr.mxu0 0.0
        %1071 = vmatpush1.msra.mxu0 0.0
        %1072 = vmatprep.subr.mxu0 0.0
        %1073 = vmatpush1.msra.mxu0 0.0
        %1074 = vmatprep.subr.mxu0 0.0
        %1075 = vmatpush1.msra.mxu0 0.0
        %1076 = vmatprep.subr.mxu0 0.0
        %1077 = vmatpush1.msra.mxu0 0.0
        %1078 = vmatprep.subr.mxu0 0.0
        %1079 = vmatpush1.msra.mxu0 0.0
        %1080 = vmatprep.subr.mxu0 0.0
        %1081 = vmatpush1.msra.mxu0 0.0
        %1082 = vmatprep.subr.mxu0 0.0
        %1083 = vmatpush1.msra.mxu0 0.0
        %1084 = vmatprep.subr.mxu0 0.0
        %1085 = vmatpush1.msra.mxu0 0.0
        %1086 = vmatprep.subr.mxu0 0.0
        %1087 = vmatpush1.msra.mxu0 0.0
        %1088 = vmatprep.subr.mxu0 0.0
        %1089 = vmatpush1.msra.mxu0 0.0
        %1090 = vmatprep.subr.mxu0 0.0
        %1091 = vmatpush1.msra.mxu0 0.0
        %1092 = vmatprep.subr.mxu0 0.0
        %1093 = vmatpush1.msra.mxu0 0.0
        %1094 = vmatprep.subr.mxu0 0.0
        %1095 = vmatpush1.msra.mxu0 0.0
        %1096 = vmatprep.mubr.f32.mxu0 0.0
        %1097 = vmatmul.mubr.f32.gmra.mrb[0].mxu0 %v1030
        %v1098 = vpop.f32.mrb[0].mxu0
        %v1099 = vadd.f32 0.0, %v1098
        %v1100 = vpop.f32.mrb[0].mxu0
        %1101 = vdwg.mxu0
        %v1102 = vld [vmem:[#allocation2] sm:$0xff]
        %1103 = vrot.lane.b32.xlu0 %v757, 112
        %v1104 = vpop.permute.xlu0 %1103
        %1106 = vrot.lane.b32.xlu0 %v1102, 112
        %v1107 = vpop.permute.xlu0 %1106
        %v1108 = vsel %vm762, %v1104, 0
        %v1110 = vsel %vm762, %v1107, 0
        %1112 = vmatprep.subr.mxu0 0.0
        %1113 = vmatpush1.xpose.msra.mxu0 %v1110
        %1114 = vmatprep.subr.mxu0 0.0
        %1115 = vmatpush1.xpose.msra.mxu0 0.0
        %1116 = vmatprep.subr.mxu0 0.0
        %1117 = vmatpush1.xpose.msra.mxu0 0.0
        %1118 = vmatprep.subr.mxu0 0.0
        %1119 = vmatpush1.xpose.msra.mxu0 0.0
        %1120 = vmatprep.subr.mxu0 0.0
        %1121 = vmatpush1.xpose.msra.mxu0 0.0
        %1122 = vmatprep.subr.mxu0 0.0
        %1123 = vmatpush1.xpose.msra.mxu0 0.0
        %1124 = vmatprep.subr.mxu0 0.0
        %1125 = vmatpush1.xpose.msra.mxu0 0.0
        %1126 = vmatprep.subr.mxu0 0.0
        %1127 = vmatpush1.xpose.msra.mxu0 0.0
        %1128 = vmatprep.subr.mxu0 0.0
        %1129 = vmatpush1.xpose.msra.mxu0 0.0
        %1130 = vmatprep.subr.mxu0 0.0
        %1131 = vmatpush1.xpose.msra.mxu0 0.0
        %1132 = vmatprep.subr.mxu0 0.0
        %1133 = vmatpush1.xpose.msra.mxu0 0.0
        %1134 = vmatprep.subr.mxu0 0.0
        %1135 = vmatpush1.xpose.msra.mxu0 0.0
        %1136 = vmatprep.subr.mxu0 0.0
        %1137 = vmatpush1.xpose.msra.mxu0 0.0
        %1138 = vmatprep.subr.mxu0 0.0
        %1139 = vmatpush1.xpose.msra.mxu0 0.0
        %1140 = vmatprep.subr.mxu0 0.0
        %1141 = vmatpush1.xpose.msra.mxu0 0.0
        %1142 = vmatprep.subr.mxu0 0.0
        %1143 = vmatpush1.xpose.msra.mxu0 0.0
        %1144 = vmatprep.subr.mxu0 0.0
        %1145 = vmatpush1.xpose.msra.mxu0 0.0
        %1146 = vmatprep.subr.mxu0 0.0
        %1147 = vmatpush1.xpose.msra.mxu0 0.0
        %1148 = vmatprep.subr.mxu0 0.0
        %1149 = vmatpush1.xpose.msra.mxu0 0.0
        %1150 = vmatprep.subr.mxu0 0.0
        %1151 = vmatpush1.xpose.msra.mxu0 0.0
        %1152 = vmatprep.subr.mxu0 0.0
        %1153 = vmatpush1.xpose.msra.mxu0 0.0
        %1154 = vmatprep.subr.mxu0 0.0
        %1155 = vmatpush1.xpose.msra.mxu0 0.0
        %1156 = vmatprep.subr.mxu0 0.0
        %1157 = vmatpush1.xpose.msra.mxu0 0.0
        %1158 = vmatprep.subr.mxu0 0.0
        %1159 = vmatpush1.xpose.msra.mxu0 0.0
        %1160 = vmatprep.subr.mxu0 0.0
        %1161 = vmatpush1.xpose.msra.mxu0 0.0
        %1162 = vmatprep.subr.mxu0 0.0
        %1163 = vmatpush1.xpose.msra.mxu0 0.0
        %1164 = vmatprep.subr.mxu0 0.0
        %1165 = vmatpush1.xpose.msra.mxu0 0.0
        %1166 = vmatprep.subr.mxu0 0.0
        %1167 = vmatpush1.xpose.msra.mxu0 0.0
        %1168 = vmatprep.subr.mxu0 0.0
        %1169 = vmatpush1.xpose.msra.mxu0 0.0
        %1170 = vmatprep.subr.mxu0 0.0
        %1171 = vmatpush1.xpose.msra.mxu0 0.0
        %1172 = vmatprep.subr.mxu0 0.0
        %1173 = vmatpush1.xpose.msra.mxu0 0.0
        %1174 = vmatprep.subr.mxu0 0.0
        %1175 = vmatpush1.xpose.msra.mxu0 0.0
        %1176 = vmatprep.mubr.f32.mxu0 0.0
        %1177 = vmatmul.mubr.f32.gmra.mrb[0].mxu0 %v1108
        %v1178 = vpop.f32.mrb[0].mxu0
        %v1179 = vadd.f32 0.0, %v1178
        %v1180 = vpop.f32.mrb[0].mxu0
        %1181 = vdwg.mxu0
        %v1182 = vsel %vm845, -1e+10, %v1179
        %v1183 = vsel %vm762, %v1182, -inf
        %1184 = vmax.xlane.f32.xlu0 %v1183
        %v1185 = vpop.xlane.xlu0 %1184
        %v1186 = vsub.f32 %v1182, %v1185
        %v1187 = vmul.f32 %v1186, 1.442695
        %v1188 = vpow.pop %v1187
        %v1189 = vsel %vm762, %v1188, 0.0
        %1190 = vadd.xlane.f32.xlu0 %v1189
        %v1191 = vpop.xlane.xlu0 %1190
        %v1192 = vrcp.pop %v1191
        %v1193 = vmul.f32 %v1188, %v1192
        %1194 = vrot.lane.b32.xlu0 %v1102, 80
        %v1195 = vpop.permute.xlu0 %1194
        %v1198 = vsel %vm762, %v1193, 0
        %1200 = vmatprep.subr.mxu0 0.0
        %1201 = vmatpush1.msra.mxu0 %v1195
        %1202 = vmatprep.subr.mxu0 0.0
        %1203 = vmatpush1.msra.mxu0 0.0
        %1204 = vmatprep.subr.mxu0 0.0
        %1205 = vmatpush1.msra.mxu0 0.0
        %1206 = vmatprep.subr.mxu0 0.0
        %1207 = vmatpush1.msra.mxu0 0.0
        %1208 = vmatprep.subr.mxu0 0.0
        %1209 = vmatpush1.msra.mxu0 0.0
        %1210 = vmatprep.subr.mxu0 0.0
        %1211 = vmatpush1.msra.mxu0 0.0
        %1212 = vmatprep.subr.mxu0 0.0
        %1213 = vmatpush1.msra.mxu0 0.0
        %1214 = vmatprep.subr.mxu0 0.0
        %1215 = vmatpush1.msra.mxu0 0.0
        %1216 = vmatprep.subr.mxu0 0.0
        %1217 = vmatpush1.msra.mxu0 0.0
        %1218 = vmatprep.subr.mxu0 0.0
        %1219 = vmatpush1.msra.mxu0 0.0
        %1220 = vmatprep.subr.mxu0 0.0
        %1221 = vmatpush1.msra.mxu0 0.0
        %1222 = vmatprep.subr.mxu0 0.0
        %1223 = vmatpush1.msra.mxu0 0.0
        %1224 = vmatprep.subr.mxu0 0.0
        %1225 = vmatpush1.msra.mxu0 0.0
        %1226 = vmatprep.subr.mxu0 0.0
        %1227 = vmatpush1.msra.mxu0 0.0
        %1228 = vmatprep.subr.mxu0 0.0
        %1229 = vmatpush1.msra.mxu0 0.0
        %1230 = vmatprep.subr.mxu0 0.0
        %1231 = vmatpush1.msra.mxu0 0.0
        %1232 = vmatprep.subr.mxu0 0.0
        %1233 = vmatpush1.msra.mxu0 0.0
        %1234 = vmatprep.subr.mxu0 0.0
        %1235 = vmatpush1.msra.mxu0 0.0
        %1236 = vmatprep.subr.mxu0 0.0
        %1237 = vmatpush1.msra.mxu0 0.0
        %1238 = vmatprep.subr.mxu0 0.0
        %1239 = vmatpush1.msra.mxu0 0.0
        %1240 = vmatprep.subr.mxu0 0.0
        %1241 = vmatpush1.msra.mxu0 0.0
        %1242 = vmatprep.subr.mxu0 0.0
        %1243 = vmatpush1.msra.mxu0 0.0
        %1244 = vmatprep.subr.mxu0 0.0
        %1245 = vmatpush1.msra.mxu0 0.0
        %1246 = vmatprep.subr.mxu0 0.0
        %1247 = vmatpush1.msra.mxu0 0.0
        %1248 = vmatprep.subr.mxu0 0.0
        %1249 = vmatpush1.msra.mxu0 0.0
        %1250 = vmatprep.subr.mxu0 0.0
        %1251 = vmatpush1.msra.mxu0 0.0
        %1252 = vmatprep.subr.mxu0 0.0
        %1253 = vmatpush1.msra.mxu0 0.0
        %1254 = vmatprep.subr.mxu0 0.0
        %1255 = vmatpush1.msra.mxu0 0.0
        %1256 = vmatprep.subr.mxu0 0.0
        %1257 = vmatpush1.msra.mxu0 0.0
        %1258 = vmatprep.subr.mxu0 0.0
        %1259 = vmatpush1.msra.mxu0 0.0
        %1260 = vmatprep.subr.mxu0 0.0
        %1261 = vmatpush1.msra.mxu0 0.0
        %1262 = vmatprep.subr.mxu0 0.0
        %1263 = vmatpush1.msra.mxu0 0.0
        %1264 = vmatprep.mubr.f32.mxu0 0.0
        %1265 = vmatmul.mubr.f32.gmra.mrb[0].mxu0 %v1198
        %v1266 = vpop.f32.mrb[0].mxu0
        %v1267 = vadd.f32 0.0, %v1266
        %v1268 = vpop.f32.mrb[0].mxu0
        %1269 = vdwg.mxu0
        %v1270 = vld [vmem:[#allocation2] sm:$0xff]
        %1271 = vrot.lane.b32.xlu0 %v757, 104
        %v1272 = vpop.permute.xlu0 %1271
        %1274 = vrot.lane.b32.xlu0 %v1270, 104
        %v1275 = vpop.permute.xlu0 %1274
        %v1276 = vsel %vm762, %v1272, 0
        %v1278 = vsel %vm762, %v1275, 0
        %1280 = vmatprep.subr.mxu0 0.0
        %1281 = vmatpush1.xpose.msra.mxu0 %v1278
        %1282 = vmatprep.subr.mxu0 0.0
        %1283 = vmatpush1.xpose.msra.mxu0 0.0
        %1284 = vmatprep.subr.mxu0 0.0
        %1285 = vmatpush1.xpose.msra.mxu0 0.0
        %1286 = vmatprep.subr.mxu0 0.0
        %1287 = vmatpush1.xpose.msra.mxu0 0.0
        %1288 = vmatprep.subr.mxu0 0.0
        %1289 = vmatpush1.xpose.msra.mxu0 0.0
        %1290 = vmatprep.subr.mxu0 0.0
        %1291 = vmatpush1.xpose.msra.mxu0 0.0
        %1292 = vmatprep.subr.mxu0 0.0
        %1293 = vmatpush1.xpose.msra.mxu0 0.0
        %1294 = vmatprep.subr.mxu0 0.0
        %1295 = vmatpush1.xpose.msra.mxu0 0.0
        %1296 = vmatprep.subr.mxu0 0.0
        %1297 = vmatpush1.xpose.msra.mxu0 0.0
        %1298 = vmatprep.subr.mxu0 0.0
        %1299 = vmatpush1.xpose.msra.mxu0 0.0
        %1300 = vmatprep.subr.mxu0 0.0
        %1301 = vmatpush1.xpose.msra.mxu0 0.0
        %1302 = vmatprep.subr.mxu0 0.0
        %1303 = vmatpush1.xpose.msra.mxu0 0.0
        %1304 = vmatprep.subr.mxu0 0.0
        %1305 = vmatpush1.xpose.msra.mxu0 0.0
        %1306 = vmatprep.subr.mxu0 0.0
        %1307 = vmatpush1.xpose.msra.mxu0 0.0
        %1308 = vmatprep.subr.mxu0 0.0
        %1309 = vmatpush1.xpose.msra.mxu0 0.0
        %1310 = vmatprep.subr.mxu0 0.0
        %1311 = vmatpush1.xpose.msra.mxu0 0.0
        %1312 = vmatprep.subr.mxu0 0.0
        %1313 = vmatpush1.xpose.msra.mxu0 0.0
        %1314 = vmatprep.subr.mxu0 0.0
        %1315 = vmatpush1.xpose.msra.mxu0 0.0
        %1316 = vmatprep.subr.mxu0 0.0
        %1317 = vmatpush1.xpose.msra.mxu0 0.0
        %1318 = vmatprep.subr.mxu0 0.0
        %1319 = vmatpush1.xpose.msra.mxu0 0.0
        %1320 = vmatprep.subr.mxu0 0.0
        %1321 = vmatpush1.xpose.msra.mxu0 0.0
        %1322 = vmatprep.subr.mxu0 0.0
        %1323 = vmatpush1.xpose.msra.mxu0 0.0
        %1324 = vmatprep.subr.mxu0 0.0
        %1325 = vmatpush1.xpose.msra.mxu0 0.0
        %1326 = vmatprep.subr.mxu0 0.0
        %1327 = vmatpush1.xpose.msra.mxu0 0.0
        %1328 = vmatprep.subr.mxu0 0.0
        %1329 = vmatpush1.xpose.msra.mxu0 0.0
        %1330 = vmatprep.subr.mxu0 0.0
        %1331 = vmatpush1.xpose.msra.mxu0 0.0
        %1332 = vmatprep.subr.mxu0 0.0
        %1333 = vmatpush1.xpose.msra.mxu0 0.0
        %1334 = vmatprep.subr.mxu0 0.0
        %1335 = vmatpush1.xpose.msra.mxu0 0.0
        %1336 = vmatprep.subr.mxu0 0.0
        %1337 = vmatpush1.xpose.msra.mxu0 0.0
        %1338 = vmatprep.subr.mxu0 0.0
        %1339 = vmatpush1.xpose.msra.mxu0 0.0
        %1340 = vmatprep.subr.mxu0 0.0
        %1341 = vmatpush1.xpose.msra.mxu0 0.0
        %1342 = vmatprep.subr.mxu0 0.0
        %1343 = vmatpush1.xpose.msra.mxu0 0.0
        %1344 = vmatprep.mubr.f32.mxu0 0.0
        %1345 = vmatmul.mubr.f32.gmra.mrb[0].mxu0 %v1276
        %v1346 = vpop.f32.mrb[0].mxu0
        %v1347 = vadd.f32 0.0, %v1346
        %v1348 = vpop.f32.mrb[0].mxu0
        %1349 = vdwg.mxu0
        %v1350 = vsel %vm845, -1e+10, %v1347
        %v1351 = vsel %vm762, %v1350, -inf
        %1352 = vmax.xlane.f32.xlu0 %v1351
        %v1353 = vpop.xlane.xlu0 %1352
        %v1354 = vsub.f32 %v1350, %v1353
        %v1355 = vmul.f32 %v1354, 1.442695
        %v1356 = vpow.pop %v1355
        %v1357 = vsel %vm762, %v1356, 0.0
        %1358 = vadd.xlane.f32.xlu0 %v1357
        %v1359 = vpop.xlane.xlu0 %1358
        %v1360 = vrcp.pop %v1359
        %v1361 = vmul.f32 %v1356, %v1360
        %1362 = vrot.lane.b32.xlu0 %v1270, 72
        %v1363 = vpop.permute.xlu0 %1362
        %v1366 = vsel %vm762, %v1361, 0
        %1368 = vmatprep.subr.mxu0 0.0
        %1369 = vmatpush1.msra.mxu0 %v1363
        %1370 = vmatprep.subr.mxu0 0.0
        %1371 = vmatpush1.msra.mxu0 0.0
        %1372 = vmatprep.subr.mxu0 0.0
        %1373 = vmatpush1.msra.mxu0 0.0
        %1374 = vmatprep.subr.mxu0 0.0
        %1375 = vmatpush1.msra.mxu0 0.0
        %1376 = vmatprep.subr.mxu0 0.0
        %1377 = vmatpush1.msra.mxu0 0.0
        %1378 = vmatprep.subr.mxu0 0.0
        %1379 = vmatpush1.msra.mxu0 0.0
        %1380 = vmatprep.subr.mxu0 0.0
        %1381 = vmatpush1.msra.mxu0 0.0
        %1382 = vmatprep.subr.mxu0 0.0
        %1383 = vmatpush1.msra.mxu0 0.0
        %1384 = vmatprep.subr.mxu0 0.0
        %1385 = vmatpush1.msra.mxu0 0.0
        %1386 = vmatprep.subr.mxu0 0.0
        %1387 = vmatpush1.msra.mxu0 0.0
        %1388 = vmatprep.subr.mxu0 0.0
        %1389 = vmatpush1.msra.mxu0 0.0
        %1390 = vmatprep.subr.mxu0 0.0
        %1391 = vmatpush1.msra.mxu0 0.0
        %1392 = vmatprep.subr.mxu0 0.0
        %1393 = vmatpush1.msra.mxu0 0.0
        %1394 = vmatprep.subr.mxu0 0.0
        %1395 = vmatpush1.msra.mxu0 0.0
        %1396 = vmatprep.subr.mxu0 0.0
        %1397 = vmatpush1.msra.mxu0 0.0
        %1398 = vmatprep.subr.mxu0 0.0
        %1399 = vmatpush1.msra.mxu0 0.0
        %1400 = vmatprep.subr.mxu0 0.0
        %1401 = vmatpush1.msra.mxu0 0.0
        %1402 = vmatprep.subr.mxu0 0.0
        %1403 = vmatpush1.msra.mxu0 0.0
        %1404 = vmatprep.subr.mxu0 0.0
        %1405 = vmatpush1.msra.mxu0 0.0
        %1406 = vmatprep.subr.mxu0 0.0
        %1407 = vmatpush1.msra.mxu0 0.0
        %1408 = vmatprep.subr.mxu0 0.0
        %1409 = vmatpush1.msra.mxu0 0.0
        %1410 = vmatprep.subr.mxu0 0.0
        %1411 = vmatpush1.msra.mxu0 0.0
        %1412 = vmatprep.subr.mxu0 0.0
        %1413 = vmatpush1.msra.mxu0 0.0
        %1414 = vmatprep.subr.mxu0 0.0
        %1415 = vmatpush1.msra.mxu0 0.0
        %1416 = vmatprep.subr.mxu0 0.0
        %1417 = vmatpush1.msra.mxu0 0.0
        %1418 = vmatprep.subr.mxu0 0.0
        %1419 = vmatpush1.msra.mxu0 0.0
        %1420 = vmatprep.subr.mxu0 0.0
        %1421 = vmatpush1.msra.mxu0 0.0
        %1422 = vmatprep.subr.mxu0 0.0
        %1423 = vmatpush1.msra.mxu0 0.0
        %1424 = vmatprep.subr.mxu0 0.0
        %1425 = vmatpush1.msra.mxu0 0.0
        %1426 = vmatprep.subr.mxu0 0.0
        %1427 = vmatpush1.msra.mxu0 0.0
        %1428 = vmatprep.subr.mxu0 0.0
        %1429 = vmatpush1.msra.mxu0 0.0
        %1430 = vmatprep.subr.mxu0 0.0
        %1431 = vmatpush1.msra.mxu0 0.0
        %1432 = vmatprep.mubr.f32.mxu0 0.0
        %1433 = vmatmul.mubr.f32.gmra.mrb[0].mxu0 %v1366
        %v1434 = vpop.f32.mrb[0].mxu0
        %v1435 = vadd.f32 0.0, %v1434
        %v1436 = vpop.f32.mrb[0].mxu0
        %1437 = vdwg.mxu0
        %1439 = vrot.lane.b32.xlu0 %v1099, 8
        %v1440 = vpop.permute.xlu0 %1439
        %1443 = vrot.lane.b32.xlu0 %v1267, 16
        %v1444 = vpop.permute.xlu0 %1443
        %1447 = vrot.lane.b32.xlu0 %v1435, 24
        %v1448 = vpop.permute.xlu0 %1447
        %v1450 = vsel %vm762, %v931, %v1440
        %vm1451 = vcmask 130048
        %v1452 = vsel %vm1451, %v1450, %v1444
        %vm1453 = vcmask 195584
        %v1454 = vsel %vm1453, %v1452, %v1448
        %v1455 = vld [vmem:[%s6] sm:$0xff]
        %v1456 = vld [vmem:[%s6 + $0x8] sm:$0xff]
        %v1457 = vld [vmem:[%s6 + $0x10] sm:$0xff]
        %v1458 = vld [vmem:[%s6 + $0x18] sm:$0xff]
        %v1459 = vld [vmem:[%s7] sm:$0x1]
        %v1461 = vlaneseq
        %v1462 = vshrl.u32 %v1461, 7
        %v1463 = vsub.s32 0, %v1462
        %v1464 = vrot.slane %v1459, %v1463
        %v1467 = vsel %vm686, %v1454, 0
        %1469 = vmatprep.subr.mxu0 0.0
        %1470 = vmatpush1.msra.mxu0 %v1455
        %1471 = vmatprep.subr.mxu0 0.0
        %1472 = vmatpush1.msra.mxu0 %v1456
        %1473 = vmatprep.subr.mxu0 0.0
        %1474 = vmatpush1.msra.mxu0 %v1457
        %1475 = vmatprep.subr.mxu0 0.0
        %1476 = vmatpush1.msra.mxu0 %v1458
        %1477 = vmatprep.subr.mxu0 0.0
        %1478 = vmatpush1.msra.mxu0 0.0
        %1479 = vmatprep.subr.mxu0 0.0
        %1480 = vmatpush1.msra.mxu0 0.0
        %1481 = vmatprep.subr.mxu0 0.0
        %1482 = vmatpush1.msra.mxu0 0.0
        %1483 = vmatprep.subr.mxu0 0.0
        %1484 = vmatpush1.msra.mxu0 0.0
        %1485 = vmatprep.subr.mxu0 0.0
        %1486 = vmatpush1.msra.mxu0 0.0
        %1487 = vmatprep.subr.mxu0 0.0
        %1488 = vmatpush1.msra.mxu0 0.0
        %1489 = vmatprep.subr.mxu0 0.0
        %1490 = vmatpush1.msra.mxu0 0.0
        %1491 = vmatprep.subr.mxu0 0.0
        %1492 = vmatpush1.msra.mxu0 0.0
        %1493 = vmatprep.subr.mxu0 0.0
        %1494 = vmatpush1.msra.mxu0 0.0
        %1495 = vmatprep.subr.mxu0 0.0
        %1496 = vmatpush1.msra.mxu0 0.0
        %1497 = vmatprep.subr.mxu0 0.0
        %1498 = vmatpush1.msra.mxu0 0.0
        %1499 = vmatprep.subr.mxu0 0.0
        %1500 = vmatpush1.msra.mxu0 0.0
        %1501 = vmatprep.subr.mxu0 0.0
        %1502 = vmatpush1.msra.mxu0 0.0
        %1503 = vmatprep.subr.mxu0 0.0
        %1504 = vmatpush1.msra.mxu0 0.0
        %1505 = vmatprep.subr.mxu0 0.0
        %1506 = vmatpush1.msra.mxu0 0.0
        %1507 = vmatprep.subr.mxu0 0.0
        %1508 = vmatpush1.msra.mxu0 0.0
        %1509 = vmatprep.subr.mxu0 0.0
        %1510 = vmatpush1.msra.mxu0 0.0
        %1511 = vmatprep.subr.mxu0 0.0
        %1512 = vmatpush1.msra.mxu0 0.0
        %1513 = vmatprep.subr.mxu0 0.0
        %1514 = vmatpush1.msra.mxu0 0.0
        %1515 = vmatprep.subr.mxu0 0.0
        %1516 = vmatpush1.msra.mxu0 0.0
        %1517 = vmatprep.subr.mxu0 0.0
        %1518 = vmatpush1.msra.mxu0 0.0
        %1519 = vmatprep.subr.mxu0 0.0
        %1520 = vmatpush1.msra.mxu0 0.0
        %1521 = vmatprep.subr.mxu0 0.0
        %1522 = vmatpush1.msra.mxu0 0.0
        %1523 = vmatprep.subr.mxu0 0.0
        %1524 = vmatpush1.msra.mxu0 0.0
        %1525 = vmatprep.subr.mxu0 0.0
        %1526 = vmatpush1.msra.mxu0 0.0
        %1527 = vmatprep.subr.mxu0 0.0
        %1528 = vmatpush1.msra.mxu0 0.0
        %1529 = vmatprep.subr.mxu0 0.0
        %1530 = vmatpush1.msra.mxu0 0.0
        %1531 = vmatprep.subr.mxu0 0.0
        %1532 = vmatpush1.msra.mxu0 0.0
        %1533 = vmatprep.mubr.f32.mxu0 0.0
        %1534 = vmatmul.mubr.f32.gmra.mrb[0].mxu0 %v1467
        %v1535 = vpop.f32.mrb[0].mxu0
        %v1536 = vadd.f32 %v1464, %v1535
        %v1537 = vpop.f32.mrb[0].mxu0
        %1538 = vdwg.mxu0
        %v1539 = vadd.f32 %v674, %v1536
        %v1540 = vsel %vm686, %v1539, 0.0
        %1541 = vadd.xlane.f32.xlu0 %v1540
        %v1542 = vpop.xlane.xlu0 %1541
        %v1543 = vrcp.pop 32.0
        %v1544 = vmul.f32 %v1542, %v1543
        %v1545 = vsub.f32 %v1539, %v1544
        %v1546 = vmul.f32 %v1545, %v1545
        %v1547 = vsel %vm686, %v1546, 0.0
        %1548 = vadd.xlane.f32.xlu0 %v1547
        %v1549 = vpop.xlane.xlu0 %1548
        %v1550 = vmul.f32 %v1549, %v1543
        %v1551 = vadd.f32 %v1550, 1e-05
        %v1552 = vrsqrt.pop %v1551
        %v1553 = vmul.f32 %v1545, %v1552
        %v1554 = vld [vmem:[%s8] sm:$0x1]
        %v1556 = vlaneseq
        %v1557 = vshrl.u32 %v1556, 7
        %v1558 = vsub.s32 0, %v1557
        %v1559 = vrot.slane %v1554, %v1558
        %v1561 = vmul.f32 %v1553, %v1559
        %v1562 = vld [vmem:[%s9] sm:$0x1]
        %v1564 = vlaneseq
        %v1565 = vshrl.u32 %v1564, 7
        %v1566 = vsub.s32 0, %v1565
        %v1567 = vrot.slane %v1562, %v1566
        %v1569 = vadd.f32 %v1561, %v1567
        %v1570 = vld [vmem:[#allocation6] sm:$0xff]
        %v1571 = vld [vmem:[#allocation6 + $0x8] sm:$0xff]
        %v1572 = vld [vmem:[#allocation6 + $0x10] sm:$0xff]
        %v1573 = vld [vmem:[#allocation6 + $0x18] sm:$0xff]
        %v1574 = vld [vmem:[%s11] sm:$0x1]
        %v1576 = vlaneseq
        %v1577 = vshrl.u32 %v1576, 7
        %v1578 = vsub.s32 0, %v1577
        %v1579 = vrot.slane %v1574, %v1578
        %v1582 = vsel %vm686, %v1569, 0
        %1584 = vmatprep.subr.mxu0 0.0
        %1585 = vmatpush1.msra.mxu0 %v1570
        %1586 = vmatprep.subr.mxu0 0.0
        %1587 = vmatpush1.msra.mxu0 %v1571
        %1588 = vmatprep.subr.mxu0 0.0
        %1589 = vmatpush1.msra.mxu0 %v1572
        %1590 = vmatprep.subr.mxu0 0.0
        %1591 = vmatpush1.msra.mxu0 %v1573
        %1592 = vmatprep.subr.mxu0 0.0
        %1593 = vmatpush1.msra.mxu0 0.0
        %1594 = vmatprep.subr.mxu0 0.0
        %1595 = vmatpush1.msra.mxu0 0.0
        %1596 = vmatprep.subr.mxu0 0.0
        %1597 = vmatpush1.msra.mxu0 0.0
        %1598 = vmatprep.subr.mxu0 0.0
        %1599 = vmatpush1.msra.mxu0 0.0
        %1600 = vmatprep.subr.mxu0 0.0
        %1601 = vmatpush1.msra.mxu0 0.0
        %1602 = vmatprep.subr.mxu0 0.0
        %1603 = vmatpush1.msra.mxu0 0.0
        %1604 = vmatprep.subr.mxu0 0.0
        %1605 = vmatpush1.msra.mxu0 0.0
        %1606 = vmatprep.subr.mxu0 0.0
        %1607 = vmatpush1.msra.mxu0 0.0
        %1608 = vmatprep.subr.mxu0 0.0
        %1609 = vmatpush1.msra.mxu0 0.0
        %1610 = vmatprep.subr.mxu0 0.0
        %1611 = vmatpush1.msra.mxu0 0.0
        %1612 = vmatprep.subr.mxu0 0.0
        %1613 = vmatpush1.msra.mxu0 0.0
        %1614 = vmatprep.subr.mxu0 0.0
        %1615 = vmatpush1.msra.mxu0 0.0
        %1616 = vmatprep.subr.mxu0 0.0
        %1617 = vmatpush1.msra.mxu0 0.0
        %1618 = vmatprep.subr.mxu0 0.0
        %1619 = vmatpush1.msra.mxu0 0.0
        %1620 = vmatprep.subr.mxu0 0.0
        %1621 = vmatpush1.msra.mxu0 0.0
        %1622 = vmatprep.subr.mxu0 0.0
        %1623 = vmatpush1.msra.mxu0 0.0
        %1624 = vmatprep.subr.mxu0 0.0
        %1625 = vmatpush1.msra.mxu0 0.0
        %1626 = vmatprep.subr.mxu0 0.0
        %1627 = vmatpush1.msra.mxu0 0.0
        %1628 = vmatprep.subr.mxu0 0.0
        %1629 = vmatpush1.msra.mxu0 0.0
        %1630 = vmatprep.subr.mxu0 0.0
        %1631 = vmatpush1.msra.mxu0 0.0
        %1632 = vmatprep.subr.mxu0 0.0
        %1633 = vmatpush1.msra.mxu0 0.0
        %1634 = vmatprep.subr.mxu0 0.0
        %1635 = vmatpush1.msra.mxu0 0.0
        %1636 = vmatprep.subr.mxu0 0.0
        %1637 = vmatpush1.msra.mxu0 0.0
        %1638 = vmatprep.subr.mxu0 0.0
        %1639 = vmatpush1.msra.mxu0 0.0
        %1640 = vmatprep.subr.mxu0 0.0
        %1641 = vmatpush1.msra.mxu0 0.0
        %1642 = vmatprep.subr.mxu0 0.0
        %1643 = vmatpush1.msra.mxu0 0.0
        %1644 = vmatprep.subr.mxu0 0.0
        %1645 = vmatpush1.msra.mxu0 0.0
        %1646 = vmatprep.subr.mxu0 0.0
        %1647 = vmatpush1.msra.mxu0 0.0
        %1648 = vmatprep.mubr.f32.mxu0 0.0
        %1649 = vmatmul.mubr.f32.gmra.mrb[0].mxu0 %v1582
        %v1650 = vpop.f32.mrb[0].mxu0
        %v1651 = vadd.f32 %v1579, %v1650
        %v1652 = vpop.f32.mrb[0].mxu0
        %1653 = vdwg.mxu0
        %v1654 = vmax.f32 %v1651, 0.0
        %v1655 = vld [vmem:[%s12] sm:$0xff]
        %v1656 = vld [vmem:[%s12 + $0x8] sm:$0xff]
        %v1657 = vld [vmem:[%s12 + $0x10] sm:$0xff]
        %v1658 = vld [vmem:[%s12 + $0x18] sm:$0xff]
        %v1659 = vld [vmem:[%s12 + $0x20] sm:$0xff]
        %v1660 = vld [vmem:[%s12 + $0x28] sm:$0xff]
        %v1661 = vld [vmem:[%s12 + $0x30] sm:$0xff]
        %v1662 = vld [vmem:[%s12 + $0x38] sm:$0xff]
        %v1663 = vld [vmem:[%s13] sm:$0x1]
        %v1665 = vlaneseq
        %v1666 = vshrl.u32 %v1665, 7
        %v1667 = vsub.s32 0, %v1666
        %v1668 = vrot.slane %v1663, %v1667
        %vm1670 = vcmask 523264
        %v1672 = vsel %vm1670, %v1654, 0
        %1674 = vmatprep.subr.mxu0 0.0
        %1675 = vmatpush1.msra.mxu0 %v1655
        %1676 = vmatprep.subr.mxu0 0.0
        %1677 = vmatpush1.msra.mxu0 %v1656
        %1678 = vmatprep.subr.mxu0 0.0
        %1679 = vmatpush1.msra.mxu0 %v1657
        %1680 = vmatprep.subr.mxu0 0.0
        %1681 = vmatpush1.msra.mxu0 %v1658
        %1682 = vmatprep.subr.mxu0 0.0
        %1683 = vmatpush1.msra.mxu0 %v1659
        %1684 = vmatprep.subr.mxu0 0.0
        %1685 = vmatpush1.msra.mxu0 %v1660
        %1686 = vmatprep.subr.mxu0 0.0
        %1687 = vmatpush1.msra.mxu0 %v1661
        %1688 = vmatprep.subr.mxu0 0.0
        %1689 = vmatpush1.msra.mxu0 %v1662
        %1690 = vmatprep.subr.mxu0 0.0
        %1691 = vmatpush1.msra.mxu0 0.0
        %1692 = vmatprep.subr.mxu0 0.0
        %1693 = vmatpush1.msra.mxu0 0.0
        %1694 = vmatprep.subr.mxu0 0.0
        %1695 = vmatpush1.msra.mxu0 0.0
        %1696 = vmatprep.subr.mxu0 0.0
        %1697 = vmatpush1.msra.mxu0 0.0
        %1698 = vmatprep.subr.mxu0 0.0
        %1699 = vmatpush1.msra.mxu0 0.0
        %1700 = vmatprep.subr.mxu0 0.0
        %1701 = vmatpush1.msra.mxu0 0.0
        %1702 = vmatprep.subr.mxu0 0.0
        %1703 = vmatpush1.msra.mxu0 0.0
        %1704 = vmatprep.subr.mxu0 0.0
        %1705 = vmatpush1.msra.mxu0 0.0
        %1706 = vmatprep.subr.mxu0 0.0
        %1707 = vmatpush1.msra.mxu0 0.0
        %1708 = vmatprep.subr.mxu0 0.0
        %1709 = vmatpush1.msra.mxu0 0.0
        %1710 = vmatprep.subr.mxu0 0.0
        %1711 = vmatpush1.msra.mxu0 0.0
        %1712 = vmatprep.subr.mxu0 0.0
        %1713 = vmatpush1.msra.mxu0 0.0
        %1714 = vmatprep.subr.mxu0 0.0
        %1715 = vmatpush1.msra.mxu0 0.0
        %1716 = vmatprep.subr.mxu0 0.0
        %1717 = vmatpush1.msra.mxu0 0.0
        %1718 = vmatprep.subr.mxu0 0.0
        %1719 = vmatpush1.msra.mxu0 0.0
        %1720 = vmatprep.subr.mxu0 0.0
        %1721 = vmatpush1.msra.mxu0 0.0
        %1722 = vmatprep.subr.mxu0 0.0
        %1723 = vmatpush1.msra.mxu0 0.0
        %1724 = vmatprep.subr.mxu0 0.0
        %1725 = vmatpush1.msra.mxu0 0.0
        %1726 = vmatprep.subr.mxu0 0.0
        %1727 = vmatpush1.msra.mxu0 0.0
        %1728 = vmatprep.subr.mxu0 0.0
        %1729 = vmatpush1.msra.mxu0 0.0
        %1730 = vmatprep.subr.mxu0 0.0
        %1731 = vmatpush1.msra.mxu0 0.0
        %1732 = vmatprep.subr.mxu0 0.0
        %1733 = vmatpush1.msra.mxu0 0.0
        %1734 = vmatprep.subr.mxu0 0.0
        %1735 = vmatpush1.msra.mxu0 0.0
        %1736 = vmatprep.subr.mxu0 0.0
        %1737 = vmatpush1.msra.mxu0 0.0
        %1738 = vmatprep.mubr.f32.mxu0 0.0
        %1739 = vmatmul.mubr.f32.gmra.mrb[0].mxu0 %v1672
        %v1740 = vpop.f32.mrb[0].mxu0
        %v1741 = vadd.f32 %v1668, %v1740
        %v1742 = vpop.f32.mrb[0].mxu0
        %1743 = vdwg.mxu0
        %v1744 = vadd.f32 %v1569, %v1741
        %v1745 = vsel %vm686, %v1744, 0.0
        %1746 = vadd.xlane.f32.xlu0 %v1745
        %v1747 = vpop.xlane.xlu0 %1746
        %v1748 = vmul.f32 %v1747, %v1543
        %v1749 = vsub.f32 %v1744, %v1748
        %v1750 = vmul.f32 %v1749, %v1749
        %v1751 = vsel %vm686, %v1750, 0.0
        %1752 = vadd.xlane.f32.xlu0 %v1751
        %v1753 = vpop.xlane.xlu0 %1752
        %v1754 = vmul.f32 %v1753, %v1543
        %v1755 = vadd.f32 %v1754, 1e-05
        %v1756 = vrsqrt.pop %v1755
        %v1757 = vmul.f32 %v1749, %v1756
        %v1758 = vld [vmem:[%s14] sm:$0x1]
        %v1760 = vlaneseq
        %v1761 = vshrl.u32 %v1760, 7
        %v1762 = vsub.s32 0, %v1761
        %v1763 = vrot.slane %v1758, %v1762
        %v1765 = vmul.f32 %v1757, %v1763
        %v1766 = vld [vmem:[%s15] sm:$0x1]
        %v1768 = vlaneseq
        %v1769 = vshrl.u32 %v1768, 7
        %v1770 = vsub.s32 0, %v1769
        %v1771 = vrot.slane %v1766, %v1770
        %v1773 = vadd.f32 %v1765, %v1771
        %1774 = vst.msk [vmem:[%s576] sm:$0xff] %vm686, %v1773
        %s1775 = sand.u32 %s402, 1
        %s1776 = scalar_lea.sflag [#allocation5], %s1775
        %s1777 = sand.u32 %s402, 1
        %s1778 = smul.addr %s1777, 8
        %s1779 = scalar_lea.vmem [#allocation8], %s1778
        // Predicated region
        $region97: #{tpu_custom_call.1} parent=83 // pred_check
          %p1780 = pneg %p412
        $region98: #{tpu_custom_call.1} parent=83 // pred_check_branch
          %1782 = sbr.rel (%p1780) target = $region100
        $region99: #{tpu_custom_call.1} parent=83 // pred_region
          %s1784 = ssub.s32 128, 128
          %1785 = vsyncadd %s1776, %s1784
          %s1786 = sadd.s32 %s39, %s38
          %s1787 = smul.addr %s1786, 128
          %s1788 = scalar_lea.hbm %s16, %s1787
          %s1790 = sshll.u32 %s1779, 4
          %s1791 = int_to_ptr.vmem [resolvable:$true] %s1790
          %1793 = dma.vmem_to_hbm [thread:$0]  %s1791, 128, %s1788, %s1776
        $region100: #{tpu_custom_call.1} parent=83 // pred_fallthru
          _
      $region84: #{tpu_custom_call.1} parent=5 // pred_fallthru
        _
      %p1794 = scmp.le.s32.totalorder 2, %s29
      // Predicated region
      $region101: #{tpu_custom_call.1} parent=5 // pred_check
        %p1795 = pneg %p1794
      $region102: #{tpu_custom_call.1} parent=5 // pred_check_branch
        %1797 = sbr.rel (%p1795) target = $region104
      $region103: #{tpu_custom_call.1} parent=5 // pred_region
        %s1798 = ssub.s32 %s29, 2
        // Predicated region
        $region105: #{tpu_custom_call.1} parent=103 // pred_check
          %p1799 = pneg %p418
        $region106: #{tpu_custom_call.1} parent=103 // pred_check_branch
          %1801 = sbr.rel (%p1799) target = $region108
        $region107: #{tpu_custom_call.1} parent=103 // pred_region
          %s1802 = sand.u32 %s403, 1
          %s1803 = scalar_lea.sflag [#allocation5], %s1802
          %s1804 = sand.u32 %s403, 1
          %s1805 = smul.addr %s1804, 8
          %s1806 = scalar_lea.vmem [#allocation8], %s1805
          %1807 = dma.done %s1803, 128
        $region108: #{tpu_custom_call.1} parent=103 // pred_fallthru
          _
      $region104: #{tpu_custom_call.1} parent=5 // pred_fallthru
        _
    $region6: #{tpu_custom_call.1} parent=1 // loop_footer
      %s33 = sadd.s32 1, %s29
    $region7: #{tpu_custom_call.1} parent=1 // loop_footer_branch
      %28 = sbr.rel target = $region3
    $region8: #{tpu_custom_call.1} parent=1 // loop_exit
      _
    %1808 = vsyncpa [#allocation4], 1
    %s1809 = scalar_lea.sflag [#allocation4], 1
    %1810 = vsyncpa %s1809, 1
    %1811 = vsyncpa [#allocation7], 1
    %1812 = vsyncpa [#allocation5], 1
    %s1813 = scalar_lea.sflag [#allocation5], 1
    %1814 = vsyncpa %s1813, 1

</llo_original>
